<compile_context>
chip_gen: v7x
topology: tpu7x:2x2x1
jax: 0.10.0
libtpu: 0.0.40
codegen_flags: <defaults>
</compile_context>

<pallas_src>
import functools

import jax
import jax.numpy as jnp
from jax.experimental import pallas as pl
from jax.experimental.pallas import tpu as pltpu

_INV_SQRT2 = 0.7071067811865476


def _round_up(x, m):
    return ((x + m - 1) // m) * m


def _vmem_capacity_bytes():
    """Chip-aware VMEM capacity; conservative 64 MiB (v7x per-TC) fallback."""
    try:
        cap = getattr(pltpu.get_tpu_info(), "vmem_capacity_bytes", None)
        if cap:
            return int(cap)
    except Exception:
        pass
    return 64 * 2 ** 20


def _mlp_kernel(x_ref, w1t_ref, b1_ref, w2t_ref, b2_ref, o_ref, acc_ref, *,
                approximate_gelu):
    """Grid = (M tiles, K tiles over mid_p); K is the inner 'arbitrary' axis.

    Per step:   acc += gelu(x @ w1t[:, k] + b1[k]) @ w2t[k, :]
    Last step:  o = (acc + b2).astype(out_dtype)
    """
    k = pl.program_id(1)

    @pl.when(k == 0)
    def _():
        acc_ref[...] = jnp.zeros_like(acc_ref)

    # dense_1 chunk: MXU in native dtype (bf16 stays bf16), f32 accumulation.
    h = jnp.dot(x_ref[...], w1t_ref[...], preferred_element_type=jnp.float32)
    h = h + b1_ref[...]                                  # bias already f32

    if approximate_gelu:
        h = jax.nn.gelu(h, approximate=True)             # tanh -> EUP slot
    else:
        # exact (erf) GELU in f32 — matches torch.nn.GELU() default.
        h = 0.5 * h * (1.0 + jax.lax.erf(h * _INV_SQRT2))

    # dense_2 chunk accumulated into the resident f32 output accumulator.
    h = h.astype(w2t_ref.dtype)
    acc_ref[...] += jnp.dot(h, w2t_ref[...], preferred_element_type=jnp.float32)

    @pl.when(k == pl.num_programs(1) - 1)
    def _():
        o_ref[...] = (acc_ref[...] + b2_ref[...]).astype(o_ref.dtype)


@functools.partial(
    jax.jit,
    static_argnames=("block_m", "tile_k", "cast_to_bf16", "approximate_gelu"))
def mlp_block(x, w1, b1, w2, b2, *, block_m=None, tile_k=None,
              cast_to_bf16=False, approximate_gelu=False):
    """Pallas implementation of MlpBlock.forward.

    x : [..., H]
    w1: [mid, H], b1: [mid]     (PyTorch nn.Linear layout: [out, in])
    w2: [H, mid], b2: [H]
    """
    orig_shape = x.shape
    H = orig_shape[-1]
    mid = w1.shape[0]
    x2d = x.reshape(-1, H)
    M = x2d.shape[0]
    out_dtype = x.dtype
    out_isz = jnp.dtype(out_dtype).itemsize

    # ---- wrapper-side layout glue (plain JAX) ------------------------------
    # Pad BOTH the hidden dim and the intermediate dim to lane-dense multiples
    # of 128 (zero padding -> exact result, unmasked stores).
    H_p = max(128, _round_up(H, 128))
    mid_p = max(128, _round_up(mid, 128))
    # v6e/v7x MXU tiles are 256x256: round the contraction dim to 256 when the
    # extra zero-padding FLOPs are < 10%.
    if (mid_p // 128) % 2 == 1 and (_round_up(mid_p, 256) - mid_p) * 10 <= mid_p:
        mid_p = _round_up(mid_p, 256)

    # Optional MXU-native bf16 cast of f32 matmul operands (f32 accumulation,
    # bias add + GELU stay f32).  Numerics-affecting -> off by default.
    if cast_to_bf16 and x2d.dtype == jnp.float32:
        x2d = x2d.astype(jnp.bfloat16)
        w1 = w1.astype(jnp.bfloat16)
        w2 = w2.astype(jnp.bfloat16)

    in_isz = x2d.dtype.itemsize
    w_isz = w1.dtype.itemsize

    # ---- tiling (chip-aware VMEM budget) ------------------------------------
    budget = max(32 * 2 ** 20,
                 min(int(0.80 * _vmem_capacity_bytes()), 100 * 2 ** 20))

    if block_m is None:
        block_m = min(512, _round_up(M, 8))
        # Guarantee >= 2 M-tiles so the "parallel" axis shards across both
        # TensorCores on v7x (negligible cost elsewhere).
        if M >= 16 and pl.cdiv(M, block_m) < 2:
            block_m = _round_up(pl.cdiv(M, 2), 8)
    else:
        block_m = max(8, _round_up(min(block_m, _round_up(M, 8)), 8))

    def _vmem_need(bm, tk):
        return (2 * bm * H_p * in_isz               # x tiles (double buffered)
                + 2 * bm * H_p * out_isz            # out tiles (double buffered)
                + 2 * H_p * tk * w_isz              # w1^T K-slab
                + 2 * tk * H_p * w_isz              # w2^T K-slab
                + 2 * 8 * tk * 4 + 2 * 8 * H_p * 4  # biases (sublane padded)
                + bm * H_p * 4)                     # f32 accumulator scratch

    if tile_k is None:
        tile_k = mid_p
        # Shrink the K slab (weight working set) first: total FLOPs constant,
        # no dense_1/GELU recompute (unlike output-N tiling).
        while tile_k > 128 and _vmem_need(block_m, tile_k) > budget:
            tile_k = max(128, _round_up(tile_k // 2, 128))
    else:
        tile_k = max(128, _round_up(min(tile_k, mid_p), 128))
    # Then shrink the M tile if still over budget.
    while block_m > 64 and _vmem_need(block_m, tile_k) > budget:
        block_m = max(64, _round_up(block_m // 2, 8))

    # Make tile_k divide the padded intermediate width (extra zero pad is exact).
    mid_p = _round_up(mid_p, tile_k)
    nk = mid_p // tile_k
    grid = (pl.cdiv(M, block_m), nk)

    # ---- pad / pre-transpose operands ----------------------------------------
    if H_p != H:
        x2d = jnp.pad(x2d, ((0, 0), (0, H_p - H)))
    w1t = jnp.pad(w1.T, ((0, H_p - H), (0, mid_p - mid)))        # [H_p, mid_p]
    w2t = jnp.pad(w2.T, ((0, mid_p - mid), (0, H_p - H)))        # [mid_p, H_p]
    b1r = jnp.pad(b1.astype(jnp.float32), (0, mid_p - mid)).reshape(1, mid_p)
    b2r = jnp.pad(b2.astype(jnp.float32), (0, H_p - H)).reshape(1, H_p)

    in_specs = [
        pl.BlockSpec((block_m, H_p), lambda i, k: (i, 0)),       # x (K-resident)
        pl.BlockSpec((H_p, tile_k), lambda i, k: (0, k)),        # w1^T K-slab
        pl.BlockSpec((1, tile_k), lambda i, k: (0, k)),          # b1 K-slab
        pl.BlockSpec((tile_k, H_p), lambda i, k: (k, 0)),        # w2^T K-slab
        pl.BlockSpec((1, H_p), lambda i, k: (0, 0)),             # b2 (resident)
    ]
    out_spec = pl.BlockSpec((block_m, H_p), lambda i, k: (i, 0))  # accumulator

    need = _vmem_need(block_m, tile_k)
    vmem_limit = int(min(budget, max(need + need // 4 + (4 << 20), 32 * 2 ** 20)))

    cost = pl.CostEstimate(
        flops=4 * M * H_p * mid_p,
        transcendentals=M * mid_p,
        bytes_accessed=(M * H_p * in_isz + M * H_p * out_isz
                        + 2 * H_p * mid_p * w_isz + (mid_p + H_p) * 4),
    )

    out2d = pl.pallas_call(
        functools.partial(_mlp_kernel, approximate_gelu=approximate_gelu),
        out_shape=jax.ShapeDtypeStruct((M, H_p), out_dtype),
        grid_spec=pltpu.PrefetchScalarGridSpec(
            num_scalar_prefetch=0,
            grid=grid,
            in_specs=in_specs,
            out_specs=out_spec,
            scratch_shapes=[pltpu.VMEM((block_m, H_p), jnp.float32)],
        ),
        compiler_params=pltpu.CompilerParams(
            dimension_semantics=("parallel", "arbitrary"),
            vmem_limit_bytes=vmem_limit,
        ),
        cost_estimate=cost,
    )(x2d, w1t, b1r, w2t, b2r)

    if H_p != H:
        out2d = out2d[:, :H]
    return out2d.reshape(orig_shape)


def init_mlp_params(key, hidden_dim, mid, dtype=jnp.float32):
    """Deterministic init mirroring nn.Linear default (uniform +/- 1/sqrt(fan_in))."""
    k1, k2, k3, k4 = jax.random.split(key, 4)
    lim1 = 1.0 / jnp.sqrt(hidden_dim)
    lim2 = 1.0 / jnp.sqrt(mid)
    w1 = jax.random.uniform(k1, (mid, hidden_dim), dtype, -lim1, lim1)  # [out, in]
    b1 = jax.random.uniform(k2, (mid,), dtype, -lim1, lim1)
    w2 = jax.random.uniform(k3, (hidden_dim, mid), dtype, -lim2, lim2)  # [out, in]
    b2 = jax.random.uniform(k4, (hidden_dim,), dtype, -lim2, lim2)
    return w1, b1, w2, b2


def _reference(x, w1, b1, w2, b2):
    """Plain-JAX reference of the PyTorch MlpBlock.forward (exact erf GELU)."""
    h = x @ w1.T + b1
    h = 0.5 * h * (1.0 + jax.lax.erf(h / jnp.sqrt(2.0)))
    return h @ w2.T + b2


# TODO(synk): the Attention block, LayerNorms, token-MLP permutes and the
# adaptive avg/max pooling + sigmoid of MLP_Channel are outside this kernel's
# scope; only the MlpBlock (mlp_channel) forward is implemented here.

if __name__ == "__main__":
    key = jax.random.PRNGKey(0)
    kx1, kp1, kx2, kp2 = jax.random.split(key, 4)

    # ---- test 1: spec-shaped f32 problem: (b, g, s, c) = (2, 4, 49, 32), rr=5
    hidden_dim = 32
    mid = hidden_dim // 5
    x = jax.random.normal(kx1, (2, 4, 49, hidden_dim), jnp.float32)
    w1, b1, w2, b2 = init_mlp_params(kp1, hidden_dim, mid)
    out = jax.block_until_ready(mlp_block(x, w1, b1, w2, b2))
    ref = _reference(x, w1, b1, w2, b2)
    assert out.shape == x.shape
    assert jnp.allclose(out, ref, atol=1e-5, rtol=1e-5), "f32 mismatch vs reference"

    # ---- test 2: K-tiled accumulator path (2 K tiles) + partial M edge tile --
    hidden_dim2, mid2 = 256, 256            # mid_p = 256, tile_k=128 -> nk = 2
    x2 = jax.random.normal(kx2, (3, 40, hidden_dim2), jnp.float32)   # M = 120
    w1b, b1b, w2b, b2b = init_mlp_params(kp2, hidden_dim2, mid2)
    out2 = jax.block_until_ready(
        mlp_block(x2, w1b, b1b, w2b, b2b, tile_k=128))
    ref2 = _reference(x2, w1b, b1b, w2b, b2b)
    assert out2.shape == x2.shape
    assert jnp.allclose(out2, ref2, atol=1e-4, rtol=1e-4), "K-tiled f32 mismatch"

    # ---- test 3: bf16 operands on the MXU with f32 accumulation --------------
    xb = x.astype(jnp.bfloat16)
    outb = jax.block_until_ready(
        mlp_block(xb, w1.astype(jnp.bfloat16), b1.astype(jnp.bfloat16),
                  w2.astype(jnp.bfloat16), b2.astype(jnp.bfloat16)))
    assert outb.dtype == jnp.bfloat16
    assert jnp.allclose(outb.astype(jnp.float32), ref, atol=7e-2, rtol=7e-2), \
        "bf16 mismatch vs f32 reference"

    # ---- test 4: opt-in bf16 cast of f32 operands (f32 output dtype kept) ----
    outc = jax.block_until_ready(mlp_block(x, w1, b1, w2, b2, cast_to_bf16=True))
    assert outc.dtype == jnp.float32
    assert jnp.allclose(outc, ref, atol=7e-2, rtol=7e-2), "cast_to_bf16 mismatch"

    print("KERNEL_OK")
</pallas_src>

<mosaic_0001>
module attributes {stable_mosaic.version = 11 : i64} {
  func.func @_mlp_kernel(%arg0: i32, %arg1: i32, %arg2: memref<200x128xf32, #tpu.memory_space<vmem>>, %arg3: memref<128x128xf32, #tpu.memory_space<vmem>>, %arg4: memref<1x128xf32, #tpu.memory_space<vmem>>, %arg5: memref<128x128xf32, #tpu.memory_space<vmem>>, %arg6: memref<1x128xf32, #tpu.memory_space<vmem>>, %arg7: memref<200x128xf32, #tpu.memory_space<vmem>>, %arg8: memref<200x128xf32, #tpu.memory_space<vmem>>) attributes {dimension_semantics = [#tpu.dimension_semantics<parallel>, #tpu.dimension_semantics<arbitrary>], iteration_bounds = array<i64: 2, 1>, scalar_prefetch = 0 : i64, scratch_operands = 1 : i64, tpu.core_type = #tpu.core_type<tc>, window_params = [{transform_indices = @transform_0, window_bounds = array<i64: 200, 128>}, {transform_indices = @transform_1, window_bounds = array<i64: 128, 128>}, {transform_indices = @transform_2, window_bounds = array<i64: 1, 128>}, {transform_indices = @transform_3, window_bounds = array<i64: 128, 128>}, {pipeline_mode = #tpu.pipeline_mode<synchronous>, transform_indices = @transform_4, window_bounds = array<i64: 1, 128>}, {transform_indices = @transform_5, window_bounds = array<i64: 200, 128>}]} {
    %c0_i32 = arith.constant 0 : i32
    %0 = arith.cmpi eq, %arg1, %c0_i32 : i32
    %1 = arith.extui %0 : i1 to i32
    %c0_i32_0 = arith.constant 0 : i32
    %2 = arith.cmpi ne, %1, %c0_i32_0 : i32
    scf.if %2 {
      %cst_18 = arith.constant 0.000000e+00 : f32
      %25 = vector.broadcast %cst_18 : f32 to vector<200x128xf32>
      %c0_19 = arith.constant 0 : index
      %c0_20 = arith.constant 0 : index
      %26 = vector.load %arg8[%c0_19, %c0_20] : memref<200x128xf32, #tpu.memory_space<vmem>>, vector<200x128xf32>
      tpu.vector_store %arg8[%c0_19, %c0_20], %25 {strides = array<i32>} : memref<200x128xf32, #tpu.memory_space<vmem>>, vector<200x128xf32>,
    } else {
    }
    %c0 = arith.constant 0 : index
    %c0_1 = arith.constant 0 : index
    %3 = vector.load %arg2[%c0, %c0_1] : memref<200x128xf32, #tpu.memory_space<vmem>>, vector<200x128xf32>
    %c0_2 = arith.constant 0 : index
    %c0_3 = arith.constant 0 : index
    %4 = vector.load %arg3[%c0_2, %c0_3] : memref<128x128xf32, #tpu.memory_space<vmem>>, vector<128x128xf32>
    %cst = arith.constant dense<0.000000e+00> : vector<200x128xf32>
    %5 = tpu.matmul %3, %4, %cst {dimension_numbers = #tpu.dot_dimension_numbers<[1], [0], [0], [1], [0, 0, 1, 1], [], []>} : vector<200x128xf32>, vector<128x128xf32>, vector<200x128xf32> -> vector<200x128xf32>
    %c0_4 = arith.constant 0 : index
    %c0_5 = arith.constant 0 : index
    %6 = vector.load %arg4[%c0_4, %c0_5] : memref<1x128xf32, #tpu.memory_space<vmem>>, vector<1x128xf32>
    %7 = vector.broadcast %6 : vector<1x128xf32> to vector<200x128xf32>
    %8 = arith.addf %5, %7 : vector<200x128xf32>
    %cst_6 = arith.constant 5.000000e-01 : f32
    %9 = vector.broadcast %cst_6 : f32 to vector<200x128xf32>
    %10 = arith.mulf %9, %8 : vector<200x128xf32>
    %cst_7 = arith.constant 0.707106769 : f32
    %11 = vector.broadcast %cst_7 : f32 to vector<200x128xf32>
    %12 = arith.mulf %8, %11 : vector<200x128xf32>
    %13 = math.erf %12 : vector<200x128xf32>
    %cst_8 = arith.constant 1.000000e+00 : f32
    %14 = vector.broadcast %cst_8 : f32 to vector<200x128xf32>
    %15 = arith.addf %14, %13 : vector<200x128xf32>
    %16 = arith.mulf %10, %15 : vector<200x128xf32>
    %c0_9 = arith.constant 0 : index
    %c0_10 = arith.constant 0 : index
    %17 = vector.load %arg8[%c0_9, %c0_10] : memref<200x128xf32, #tpu.memory_space<vmem>>, vector<200x128xf32>
    %c0_11 = arith.constant 0 : index
    %c0_12 = arith.constant 0 : index
    %18 = vector.load %arg5[%c0_11, %c0_12] : memref<128x128xf32, #tpu.memory_space<vmem>>, vector<128x128xf32>
    %cst_13 = arith.constant dense<0.000000e+00> : vector<200x128xf32>
    %19 = tpu.matmul %16, %18, %cst_13 {dimension_numbers = #tpu.dot_dimension_numbers<[1], [0], [0], [1], [0, 0, 1, 1], [], []>} : vector<200x128xf32>, vector<128x128xf32>, vector<200x128xf32> -> vector<200x128xf32>
    %20 = arith.addf %17, %19 : vector<200x128xf32>
    %c0_14 = arith.constant 0 : index
    %c0_15 = arith.constant 0 : index
    %21 = vector.load %arg8[%c0_14, %c0_15] : memref<200x128xf32, #tpu.memory_space<vmem>>, vector<200x128xf32>
    tpu.vector_store %arg8[%c0_14, %c0_15], %20 {strides = array<i32>} : memref<200x128xf32, #tpu.memory_space<vmem>>, vector<200x128xf32>,
    %c0_i32_16 = arith.constant 0 : i32
    %22 = arith.cmpi eq, %arg1, %c0_i32_16 : i32
    %23 = arith.extui %22 : i1 to i32
    %c0_i32_17 = arith.constant 0 : i32
    %24 = arith.cmpi ne, %23, %c0_i32_17 : i32
    scf.if %24 {
      %c0_18 = arith.constant 0 : index
      %c0_19 = arith.constant 0 : index
      %25 = vector.load %arg8[%c0_18, %c0_19] : memref<200x128xf32, #tpu.memory_space<vmem>>, vector<200x128xf32>
      %c0_20 = arith.constant 0 : index
      %c0_21 = arith.constant 0 : index
      %26 = vector.load %arg6[%c0_20, %c0_21] : memref<1x128xf32, #tpu.memory_space<vmem>>, vector<1x128xf32>
      %27 = vector.broadcast %26 : vector<1x128xf32> to vector<200x128xf32>
      %28 = arith.addf %25, %27 : vector<200x128xf32>
      %c0_22 = arith.constant 0 : index
      %c0_23 = arith.constant 0 : index
      %29 = vector.load %arg7[%c0_22, %c0_23] : memref<200x128xf32, #tpu.memory_space<vmem>>, vector<200x128xf32>
      tpu.vector_store %arg7[%c0_22, %c0_23], %28 {strides = array<i32>} : memref<200x128xf32, #tpu.memory_space<vmem>>, vector<200x128xf32>,
    } else {
    }
    return
  }
  func.func @transform_0(%arg0: i32, %arg1: i32) -> (i32, i32) {
    %c0_i32 = arith.constant 0 : i32
    %c0_i32_0 = arith.constant 0 : i32
    return %arg0, %c0_i32 : i32, i32
  }
  func.func @transform_1(%arg0: i32, %arg1: i32) -> (i32, i32) {
    %c0_i32 = arith.constant 0 : i32
    %c0_i32_0 = arith.constant 0 : i32
    return %c0_i32, %arg1 : i32, i32
  }
  func.func @transform_2(%arg0: i32, %arg1: i32) -> (i32, i32) {
    %c0_i32 = arith.constant 0 : i32
    %c0_i32_0 = arith.constant 0 : i32
    return %c0_i32, %arg1 : i32, i32
  }
  func.func @transform_3(%arg0: i32, %arg1: i32) -> (i32, i32) {
    %c0_i32 = arith.constant 0 : i32
    %c0_i32_0 = arith.constant 0 : i32
    return %arg1, %c0_i32 : i32, i32
  }
  func.func @transform_4(%arg0: i32, %arg1: i32) -> (i32, i32) {
    %c0_i32 = arith.constant 0 : i32
    %c0_i32_0 = arith.constant 0 : i32
    %c0_i32_1 = arith.constant 0 : i32
    return %c0_i32, %c0_i32_0 : i32, i32
  }
  func.func @transform_5(%arg0: i32, %arg1: i32) -> (i32, i32) {
    %c0_i32 = arith.constant 0 : i32
    %c0_i32_0 = arith.constant 0 : i32
    return %arg0, %c0_i32 : i32, i32
  }
}

</mosaic_0001>

<llo_original>
// kernel: mlp_block.1
$region0: #{mlp_block.1}
  #allocation0 [shape = 'u32[]', space=smem, size = 0x4, offset = 0x4, fixed_abs, tag = 'smem constant byte address 0x4 - core index']
  #allocation1 [shape = 'u32[144,128]{1,0:T(1,128)}', space=vmem, size = 0x12000, scoped, tag = 'internal scratch']
  #allocation2 [shape = 'f32[200,128]{1,0:T(8,128)}', space=vmem, size = 0x19000, scoped, tag = 'scratch operand']
  %s0 = inlined_call_operand.vmem [shape: f32[392,128], index: 0, kind: input, shape index: {}]
  %s1 = inlined_call_operand.vmem [shape: f32[128,128], index: 1, kind: input, shape index: {}]
  %s2 = inlined_call_operand.vmem [shape: f32[1,128], index: 2, kind: input, shape index: {}]
  %s3 = inlined_call_operand.vmem [shape: f32[128,128], index: 3, kind: input, shape index: {}]
  %s4 = inlined_call_operand.vmem [shape: f32[1,128], index: 4, kind: input, shape index: {}]
  %s5 = inlined_call_operand.vmem [shape: f32[392,128], index: 5, kind: output, shape index: {}]
  %s6 = sld [smem:[#allocation0]]
  $region109: #{mlp_block.1} parent=0
    _
  %s8 = ssub.s32 1, %s6
  %s9 = scalar_select 0, %s8, %s6
  $region1: #{mlp_block.1} parent=0
    #allocation3 [shape = 'u8[204800]{0}', space=vmem, size = 0x32000, scoped, tag = 'output window, operand 0']
    loop: start=0, step=1, limit=4
    $region2: #{mlp_block.1} parent=1 // loop_pre_header
      _
    $region3: #{mlp_block.1} parent=1 // loop_header
      %s11 = sphi 0, %s15
      %p12 = scmp.ge.s32.totalorder %s11, 4
      %s18 = sphi 0, %s30
      %s19 = sphi 0, %s26
      %s20 = sphi 0, %s18
      %s21 = sphi 0, %s19
      %s22 = sphi 0, %s20
      %s23 = sphi 0, %s21
      %s33 = sphi 0, %s35
      %s36 = sphi 0, %s33
      %s37 = sphi 0, %s36
      %s53 = sphi 0, %s37
      %s59 = sphi 0, %s61
      %s62 = sphi 0, %s59
      %s63 = sphi 0, %s62
      %s79 = sphi 0, %s63
      %s85 = sphi 0, %s87
      %s88 = sphi 0, %s85
      %s89 = sphi 0, %s88
      %s105 = sphi 0, %s89
      %s111 = sphi 0, %s113
      %s114 = sphi 0, %s111
      %s115 = sphi 0, %s114
      %s131 = sphi 0, %s115
      %s135 = sphi 0, %s135
      %s137 = sphi 0, %s135
      %s138 = sphi 0, %s137
      %s152 = sphi 0, %s138
      %s158 = sphi 0, %s160
      %s161 = sphi 0, %s158
      %s162 = sphi 0, %s161
      %s178 = sphi 0, %s162
    $region4: #{mlp_block.1} parent=1 // loop_header_branch
      %14 = sbr.rel (%p12) target = $region8
    $region5: #{mlp_block.1} parent=1 // loop_body
      %s16 = ssub.s32 %s11, 1
      %s17 = ssub.s32 %s11, 2
      %s24 = sadd.s32 1, %s19
      %p25 = scmp.ge.s32.totalorder %s24, 1
      %s26 = scalar_select %p25, 0, %s24
      %s27 = sadd.s32 1, %s18
      %s28 = scalar_select %p25, %s27, %s18
      %p29 = scmp.ge.s32.totalorder %s28, 2
      %s30 = scalar_select %p29, 0, %s28
      %s31 = ssub.s32 %s18, %s30
      %p32 = scmp.eq.s32.totalorder %s31, 0
      %s34 = sadd.s32 %s33, 1
      %s35 = scalar_select %p32, %s33, %s34
      %p38 = pneg %p32
      %p39 = scmp.eq.s32.totalorder %s11, 1
      %p40 = por %p38, %p39
      %p41 = scmp.ne.s32.totalorder %s33, %s36
      %p42 = scmp.eq.s32.totalorder %s11, 0
      %p43 = por %p41, %p42
      %p44 = scmp.ne.s32.totalorder %s33, %s36
      %p45 = scmp.eq.s32.totalorder %s16, 1
      %p46 = por %p44, %p45
      %p47 = scmp.ne.s32.totalorder %s36, %s37
      %p48 = scmp.eq.s32.totalorder %s16, 0
      %p49 = por %p47, %p48
      %p50 = scmp.ne.s32.totalorder %s36, %s37
      %p51 = scmp.eq.s32.totalorder %s17, 1
      %p52 = por %p50, %p51
      %p54 = scmp.ne.s32.totalorder %s37, %s53
      %p55 = scmp.eq.s32.totalorder %s17, 0
      %p56 = por %p54, %p55
      %s57 = ssub.s32 %s19, %s26
      %p58 = scmp.eq.s32.totalorder %s57, 0
      %s60 = sadd.s32 %s59, 1
      %s61 = scalar_select %p58, %s59, %s60
      %p64 = pneg %p58
      %p65 = scmp.eq.s32.totalorder %s11, 1
      %p66 = por %p64, %p65
      %p67 = scmp.ne.s32.totalorder %s59, %s62
      %p68 = scmp.eq.s32.totalorder %s11, 0
      %p69 = por %p67, %p68
      %p70 = scmp.ne.s32.totalorder %s59, %s62
      %p71 = scmp.eq.s32.totalorder %s16, 1
      %p72 = por %p70, %p71
      %p73 = scmp.ne.s32.totalorder %s62, %s63
      %p74 = scmp.eq.s32.totalorder %s16, 0
      %p75 = por %p73, %p74
      %p76 = scmp.ne.s32.totalorder %s62, %s63
      %p77 = scmp.eq.s32.totalorder %s17, 1
      %p78 = por %p76, %p77
      %p80 = scmp.ne.s32.totalorder %s63, %s79
      %p81 = scmp.eq.s32.totalorder %s17, 0
      %p82 = por %p80, %p81
      %s83 = ssub.s32 %s19, %s26
      %p84 = scmp.eq.s32.totalorder %s83, 0
      %s86 = sadd.s32 %s85, 1
      %s87 = scalar_select %p84, %s85, %s86
      %p90 = pneg %p84
      %p91 = scmp.eq.s32.totalorder %s11, 1
      %p92 = por %p90, %p91
      %p93 = scmp.ne.s32.totalorder %s85, %s88
      %p94 = scmp.eq.s32.totalorder %s11, 0
      %p95 = por %p93, %p94
      %p96 = scmp.ne.s32.totalorder %s85, %s88
      %p97 = scmp.eq.s32.totalorder %s16, 1
      %p98 = por %p96, %p97
      %p99 = scmp.ne.s32.totalorder %s88, %s89
      %p100 = scmp.eq.s32.totalorder %s16, 0
      %p101 = por %p99, %p100
      %p102 = scmp.ne.s32.totalorder %s88, %s89
      %p103 = scmp.eq.s32.totalorder %s17, 1
      %p104 = por %p102, %p103
      %p106 = scmp.ne.s32.totalorder %s89, %s105
      %p107 = scmp.eq.s32.totalorder %s17, 0
      %p108 = por %p106, %p107
      %s109 = ssub.s32 %s19, %s26
      %p110 = scmp.eq.s32.totalorder %s109, 0
      %s112 = sadd.s32 %s111, 1
      %s113 = scalar_select %p110, %s111, %s112
      %p116 = pneg %p110
      %p117 = scmp.eq.s32.totalorder %s11, 1
      %p118 = por %p116, %p117
      %p119 = scmp.ne.s32.totalorder %s111, %s114
      %p120 = scmp.eq.s32.totalorder %s11, 0
      %p121 = por %p119, %p120
      %p122 = scmp.ne.s32.totalorder %s111, %s114
      %p123 = scmp.eq.s32.totalorder %s16, 1
      %p124 = por %p122, %p123
      %p125 = scmp.ne.s32.totalorder %s114, %s115
      %p126 = scmp.eq.s32.totalorder %s16, 0
      %p127 = por %p125, %p126
      %p128 = scmp.ne.s32.totalorder %s114, %s115
      %p129 = scmp.eq.s32.totalorder %s17, 1
      %p130 = por %p128, %p129
      %p132 = scmp.ne.s32.totalorder %s115, %s131
      %p133 = scmp.eq.s32.totalorder %s17, 0
      %p134 = por %p132, %p133
      %s136 = sadd.s32 %s135, 1
      %p139 = scmp.eq.s32.totalorder %s11, 1
      %p140 = scmp.ne.s32.totalorder %s135, %s137
      %p141 = scmp.eq.s32.totalorder %s11, 0
      %p142 = por %p140, %p141
      %p143 = scmp.ne.s32.totalorder %s135, %s137
      %p144 = scmp.eq.s32.totalorder %s16, 1
      %p145 = por %p143, %p144
      %p146 = scmp.ne.s32.totalorder %s137, %s138
      %p147 = scmp.eq.s32.totalorder %s16, 0
      %p148 = por %p146, %p147
      %p149 = scmp.ne.s32.totalorder %s137, %s138
      %p150 = scmp.eq.s32.totalorder %s17, 1
      %p151 = por %p149, %p150
      %p153 = scmp.ne.s32.totalorder %s138, %s152
      %p154 = scmp.eq.s32.totalorder %s17, 0
      %p155 = por %p153, %p154
      %s156 = ssub.s32 %s18, %s30
      %p157 = scmp.eq.s32.totalorder %s156, 0
      %s159 = sadd.s32 %s158, 1
      %s160 = scalar_select %p157, %s158, %s159
      %p163 = pneg %p157
      %p164 = scmp.eq.s32.totalorder %s11, 1
      %p165 = por %p163, %p164
      %p166 = scmp.ne.s32.totalorder %s158, %s161
      %p167 = scmp.eq.s32.totalorder %s11, 0
      %p168 = por %p166, %p167
      %p169 = scmp.ne.s32.totalorder %s158, %s161
      %p170 = scmp.eq.s32.totalorder %s16, 1
      %p171 = por %p169, %p170
      %p172 = scmp.ne.s32.totalorder %s161, %s162
      %p173 = scmp.eq.s32.totalorder %s16, 0
      %p174 = por %p172, %p173
      %p175 = scmp.ne.s32.totalorder %s161, %s162
      %p176 = scmp.eq.s32.totalorder %s17, 1
      %p177 = por %p175, %p176
      %p179 = scmp.ne.s32.totalorder %s162, %s178
      %p180 = scmp.eq.s32.totalorder %s17, 0
      %p181 = por %p179, %p180
      %p182 = scmp.le.s32.totalorder 1, %s11
      %p183 = scmp.lt.s32.totalorder %s11, 3
      %p184 = pnand %p182, %p183
      %p185 = pneg %p184
      // Predicated region
      $region9: #{mlp_block.1} parent=5 // pred_check
        _
      $region10: #{mlp_block.1} parent=5 // pred_check_branch
        %187 = sbr.rel (%p184) target = $region12
      $region11: #{mlp_block.1} parent=5 // pred_region
        %s188 = ssub.s32 %s11, 1
        // Predicated region
        $region13: #{mlp_block.1} parent=11 // pred_check
          %p189 = pneg %p75
        $region14: #{mlp_block.1} parent=11 // pred_check_branch
          %191 = sbr.rel (%p189) target = $region16
        $region15: #{mlp_block.1} parent=11 // pred_region
          %p192 = scmp.lt.s32.totalorder %s21, 0
          %s193 = scalar_select %p192, %s21, 0
          %s194 = smul.addr %s193, 8
          %s195 = scalar_lea.vmem %s1, %s194
        $region16: #{mlp_block.1} parent=11 // pred_fallthru
          _
        // Predicated region
        $region17: #{mlp_block.1} parent=11 // pred_check
          %p196 = pneg %p101
        $region18: #{mlp_block.1} parent=11 // pred_check_branch
          %198 = sbr.rel (%p196) target = $region20
        $region19: #{mlp_block.1} parent=11 // pred_region
          %p199 = scmp.lt.s32.totalorder %s21, 0
          %s200 = scalar_select %p199, %s21, 0
          %s201 = scalar_lea.vmem %s2, %s200
        $region20: #{mlp_block.1} parent=11 // pred_fallthru
          _
        // Predicated region
        $region21: #{mlp_block.1} parent=11 // pred_check
          %p202 = pneg %p127
        $region22: #{mlp_block.1} parent=11 // pred_check_branch
          %204 = sbr.rel (%p202) target = $region24
        $region23: #{mlp_block.1} parent=11 // pred_region
          %s205 = smul.u32 16, %s21
          %p206 = scmp.lt.s32.totalorder %s205, 15
          %s207 = scalar_select %p206, %s205, 15
          %s208 = smul.addr %s207, 8
          %s209 = scalar_lea.vmem %s3, %s208
          %s210 = smul.u32 16, %s21
        $region24: #{mlp_block.1} parent=11 // pred_fallthru
          _
        // Predicated region
        $region25: #{mlp_block.1} parent=11 // pred_check
          %p211 = pneg %p148
        $region26: #{mlp_block.1} parent=11 // pred_check_branch
          %213 = sbr.rel (%p211) target = $region28
        $region27: #{mlp_block.1} parent=11 // pred_region
          _
        $region28: #{mlp_block.1} parent=11 // pred_fallthru
          _
      $region12: #{mlp_block.1} parent=5 // pred_fallthru
        _
      %p214 = scmp.lt.s32.totalorder %s11, 2
      // Predicated region
      $region29: #{mlp_block.1} parent=5 // pred_check
        %p215 = pneg %p214
      $region30: #{mlp_block.1} parent=5 // pred_check_branch
        %217 = sbr.rel (%p215) target = $region32
      $region31: #{mlp_block.1} parent=5 // pred_region
        // Predicated region
        $region33: #{mlp_block.1} parent=31 // pred_check
          %p218 = pneg %p43
        $region34: #{mlp_block.1} parent=31 // pred_check_branch
          %220 = sbr.rel (%p218) target = $region36
        $region35: #{mlp_block.1} parent=31 // pred_region
          %s221 = smul.u32 25, %s18
          %s222 = ssub.s32 49, %s221
          %p223 = scmp.lt.s32.totalorder %s222, 25
          %s224 = scalar_select %p223, %s222, 25
          %s225 = smul.u32 128, %s224
          %p226 = scmp.lt.s32.totalorder %s221, 48
          %s227 = scalar_select %p226, %s221, 48
          %s228 = smul.addr %s227, 8
          %s229 = scalar_lea.vmem %s0, %s228
          %s230 = smul.u32 25, %s18
          %s231 = ssub.s32 49, %s230
          %p232 = scmp.lt.s32.totalorder %s231, 25
          %s233 = scalar_select %p232, %s231, 25
          %s234 = smul.u32 128, %s233
        $region36: #{mlp_block.1} parent=31 // pred_fallthru
          _
      $region32: #{mlp_block.1} parent=5 // pred_fallthru
        _
      %p235 = scmp.le.s32.totalorder 1, %s11
      %p236 = scmp.lt.s32.totalorder %s11, 3
      %p237 = pnand %p235, %p236
      %p238 = pneg %p237
      // Predicated region
      $region37: #{mlp_block.1} parent=5 // pred_check
        _
      $region38: #{mlp_block.1} parent=5 // pred_check_branch
        %240 = sbr.rel (%p237) target = $region40
      $region39: #{mlp_block.1} parent=5 // pred_region
        %s241 = ssub.s32 %s11, 1
        %s242 = smul.u32 25, %s20
        %s243 = ssub.s32 49, %s242
        %p244 = scmp.lt.s32.totalorder %s243, 25
        %s245 = scalar_select %p244, %s243, 25
        %s246 = smul.u32 128, %s245
        %p247 = scmp.lt.s32.totalorder %s242, 48
        %s248 = scalar_select %p247, %s242, 48
        %s249 = smul.addr %s248, 8
        %s250 = scalar_lea.vmem %s0, %s249
        %p251 = pneg %p49
        %p252 = pneg %p46
        %p253 = scmp.lt.s32.totalorder %s21, 0
        %s254 = scalar_select %p253, %s21, 0
        %s255 = smul.addr %s254, 8
        %s256 = scalar_lea.vmem %s1, %s255
        %p257 = pneg %p75
        %p258 = pneg %p72
        %p259 = scmp.lt.s32.totalorder %s21, 0
        %s260 = scalar_select %p259, %s21, 0
        %s261 = scalar_lea.vmem %s2, %s260
        %p262 = pneg %p101
        %p263 = pneg %p98
        %s264 = smul.u32 16, %s21
        %p265 = scmp.lt.s32.totalorder %s264, 15
        %s266 = scalar_select %p265, %s264, 15
        %s267 = smul.addr %s266, 8
        %s268 = scalar_lea.vmem %s3, %s267
        %p269 = pneg %p127
        %p270 = pneg %p124
        %p271 = pneg %p148
        %p272 = pneg %p145
        %p273 = pneg %p174
        %p274 = pneg %p171
        %s275 = sand.u32 %s161, 1
        %s276 = sand.u32 %s161, 1
        %s277 = smul.addr %s276, 200
        %s278 = scalar_lea.vmem [#allocation3], %s277
        %s279 = smul.u32 25, %s20
        %s280 = ssub.s32 49, %s279
        %p281 = scmp.lt.s32.totalorder %s280, 25
        %s282 = scalar_select %p281, %s280, 25
        %s283 = smul.u32 128, %s282
        %p284 = scmp.lt.s32.totalorder %s279, 48
        %s285 = scalar_select %p284, %s279, 48
        %s286 = smul.addr %s285, 8
        %s287 = scalar_lea.vmem %s0, %s286
        %s288 = smul.u32 25, %s20
        %s289 = ssub.s32 49, %s288
        %p290 = scmp.lt.s32.totalorder %s289, 25
        %s291 = scalar_select %p290, %s289, 25
        %s292 = smul.u32 128, %s291
        %p293 = scmp.lt.s32.totalorder %s21, 0
        %s294 = scalar_select %p293, %s21, 0
        %s295 = smul.addr %s294, 8
        %s296 = scalar_lea.vmem %s1, %s295
        %p297 = scmp.lt.s32.totalorder %s21, 0
        %s298 = scalar_select %p297, %s21, 0
        %s299 = scalar_lea.vmem %s2, %s298
        %s300 = smul.u32 16, %s21
        %p301 = scmp.lt.s32.totalorder %s300, 15
        %s302 = scalar_select %p301, %s300, 15
        %s303 = smul.addr %s302, 8
        %s304 = scalar_lea.vmem %s3, %s303
        %s305 = smul.u32 16, %s21
        %s306 = smul.u32 25, %s20
        %s307 = ssub.s32 49, %s306
        %p308 = scmp.lt.s32.totalorder %s307, 25
        %s309 = scalar_select %p308, %s307, 25
        %s310 = smul.u32 128, %s309
        %p311 = scmp.eq.s32.totalorder %s21, 0
        // Predicated region
        $region41: #{mlp_block.1} parent=39 // pred_check
          %p312 = pneg %p311
        $region42: #{mlp_block.1} parent=39 // pred_check_branch
          %314 = sbr.rel (%p312) target = $region44
        $region43: #{mlp_block.1} parent=39 // pred_region
          %315 = vst [vmem:[#allocation2] sm:$0xff] 0.0
          %316 = vst [vmem:[#allocation2 + $0x8] sm:$0xff] 0.0
          %317 = vst [vmem:[#allocation2 + $0x10] sm:$0xff] 0.0
          %318 = vst [vmem:[#allocation2 + $0x18] sm:$0xff] 0.0
          %319 = vst [vmem:[#allocation2 + $0x20] sm:$0xff] 0.0
          %320 = vst [vmem:[#allocation2 + $0x28] sm:$0xff] 0.0
          %321 = vst [vmem:[#allocation2 + $0x30] sm:$0xff] 0.0
          %322 = vst [vmem:[#allocation2 + $0x38] sm:$0xff] 0.0
          %323 = vst [vmem:[#allocation2 + $0x40] sm:$0xff] 0.0
          %324 = vst [vmem:[#allocation2 + $0x48] sm:$0xff] 0.0
          %325 = vst [vmem:[#allocation2 + $0x50] sm:$0xff] 0.0
          %326 = vst [vmem:[#allocation2 + $0x58] sm:$0xff] 0.0
          %327 = vst [vmem:[#allocation2 + $0x60] sm:$0xff] 0.0
          %328 = vst [vmem:[#allocation2 + $0x68] sm:$0xff] 0.0
          %329 = vst [vmem:[#allocation2 + $0x70] sm:$0xff] 0.0
          %330 = vst [vmem:[#allocation2 + $0x78] sm:$0xff] 0.0
          %331 = vst [vmem:[#allocation2 + $0x80] sm:$0xff] 0.0
          %332 = vst [vmem:[#allocation2 + $0x88] sm:$0xff] 0.0
          %333 = vst [vmem:[#allocation2 + $0x90] sm:$0xff] 0.0
          %334 = vst [vmem:[#allocation2 + $0x98] sm:$0xff] 0.0
          %335 = vst [vmem:[#allocation2 + $0xa0] sm:$0xff] 0.0
          %336 = vst [vmem:[#allocation2 + $0xa8] sm:$0xff] 0.0
          %337 = vst [vmem:[#allocation2 + $0xb0] sm:$0xff] 0.0
          %338 = vst [vmem:[#allocation2 + $0xb8] sm:$0xff] 0.0
          %339 = vst [vmem:[#allocation2 + $0xc0] sm:$0xff] 0.0
        $region44: #{mlp_block.1} parent=39 // pred_fallthru
          _
        %v340 = vld [vmem:[%s287] sm:$0xff]
        %v341 = vld [vmem:[%s287 + $0x8] sm:$0xff]
        %v342 = vld [vmem:[%s287 + $0x10] sm:$0xff]
        %v343 = vld [vmem:[%s287 + $0x18] sm:$0xff]
        %v344 = vld [vmem:[%s287 + $0x20] sm:$0xff]
        %v345 = vld [vmem:[%s287 + $0x28] sm:$0xff]
        %v346 = vld [vmem:[%s287 + $0x30] sm:$0xff]
        %v347 = vld [vmem:[%s287 + $0x38] sm:$0xff]
        %v348 = vld [vmem:[%s287 + $0x40] sm:$0xff]
        %v349 = vld [vmem:[%s287 + $0x48] sm:$0xff]
        %v350 = vld [vmem:[%s287 + $0x50] sm:$0xff]
        %v351 = vld [vmem:[%s287 + $0x58] sm:$0xff]
        %v352 = vld [vmem:[%s287 + $0x60] sm:$0xff]
        %v353 = vld [vmem:[%s287 + $0x68] sm:$0xff]
        %v354 = vld [vmem:[%s287 + $0x70] sm:$0xff]
        %v355 = vld [vmem:[%s287 + $0x78] sm:$0xff]
        %v356 = vld [vmem:[%s287 + $0x80] sm:$0xff]
        %v357 = vld [vmem:[%s287 + $0x88] sm:$0xff]
        %v358 = vld [vmem:[%s287 + $0x90] sm:$0xff]
        %v359 = vld [vmem:[%s287 + $0x98] sm:$0xff]
        %v360 = vld [vmem:[%s287 + $0xa0] sm:$0xff]
        %v361 = vld [vmem:[%s287 + $0xa8] sm:$0xff]
        %v362 = vld [vmem:[%s287 + $0xb0] sm:$0xff]
        %v363 = vld [vmem:[%s287 + $0xb8] sm:$0xff]
        %v364 = vld [vmem:[%s287 + $0xc0] sm:$0xff]
        %v365 = vld [vmem:[%s296] sm:$0xff]
        %v366 = vld [vmem:[%s296 + $0x8] sm:$0xff]
        %v367 = vld [vmem:[%s296 + $0x10] sm:$0xff]
        %v368 = vld [vmem:[%s296 + $0x18] sm:$0xff]
        %v369 = vld [vmem:[%s296 + $0x20] sm:$0xff]
        %v370 = vld [vmem:[%s296 + $0x28] sm:$0xff]
        %v371 = vld [vmem:[%s296 + $0x30] sm:$0xff]
        %v372 = vld [vmem:[%s296 + $0x38] sm:$0xff]
        %v373 = vld [vmem:[%s296 + $0x40] sm:$0xff]
        %v374 = vld [vmem:[%s296 + $0x48] sm:$0xff]
        %v375 = vld [vmem:[%s296 + $0x50] sm:$0xff]
        %v376 = vld [vmem:[%s296 + $0x58] sm:$0xff]
        %v377 = vld [vmem:[%s296 + $0x60] sm:$0xff]
        %v378 = vld [vmem:[%s296 + $0x68] sm:$0xff]
        %v379 = vld [vmem:[%s296 + $0x70] sm:$0xff]
        %v380 = vld [vmem:[%s296 + $0x78] sm:$0xff]
        %v381 = vld [vmem:[%s299] sm:$0x1]
        %v383 = vlaneseq
        %v384 = vshrl.u32 %v383, 7
        %v385 = vsub.s32 0, %v384
        %v386 = vrot.slane %v381, %v385
        %388 = vmatprep.subr.mxu0 0.0
        %389 = vmatpush1.msra.mxu0 %v365
        %390 = vmatprep.subr.mxu0 0.0
        %391 = vmatpush1.msra.mxu0 %v366
        %392 = vmatprep.subr.mxu0 0.0
        %393 = vmatpush1.msra.mxu0 %v367
        %394 = vmatprep.subr.mxu0 0.0
        %395 = vmatpush1.msra.mxu0 %v368
        %396 = vmatprep.subr.mxu0 0.0
        %397 = vmatpush1.msra.mxu0 %v369
        %398 = vmatprep.subr.mxu0 0.0
        %399 = vmatpush1.msra.mxu0 %v370
        %400 = vmatprep.subr.mxu0 0.0
        %401 = vmatpush1.msra.mxu0 %v371
        %402 = vmatprep.subr.mxu0 0.0
        %403 = vmatpush1.msra.mxu0 %v372
        %404 = vmatprep.subr.mxu0 0.0
        %405 = vmatpush1.msra.mxu0 %v373
        %406 = vmatprep.subr.mxu0 0.0
        %407 = vmatpush1.msra.mxu0 %v374
        %408 = vmatprep.subr.mxu0 0.0
        %409 = vmatpush1.msra.mxu0 %v375
        %410 = vmatprep.subr.mxu0 0.0
        %411 = vmatpush1.msra.mxu0 %v376
        %412 = vmatprep.subr.mxu0 0.0
        %413 = vmatpush1.msra.mxu0 %v377
        %414 = vmatprep.subr.mxu0 0.0
        %415 = vmatpush1.msra.mxu0 %v378
        %416 = vmatprep.subr.mxu0 0.0
        %417 = vmatpush1.msra.mxu0 %v379
        %418 = vmatprep.subr.mxu0 0.0
        %419 = vmatpush1.msra.mxu0 %v380
        %420 = vmatprep.subr.mxu0 0.0
        %421 = vmatpush1.msra.mxu0 0.0
        %422 = vmatprep.subr.mxu0 0.0
        %423 = vmatpush1.msra.mxu0 0.0
        %424 = vmatprep.subr.mxu0 0.0
        %425 = vmatpush1.msra.mxu0 0.0
        %426 = vmatprep.subr.mxu0 0.0
        %427 = vmatpush1.msra.mxu0 0.0
        %428 = vmatprep.subr.mxu0 0.0
        %429 = vmatpush1.msra.mxu0 0.0
        %430 = vmatprep.subr.mxu0 0.0
        %431 = vmatpush1.msra.mxu0 0.0
        %432 = vmatprep.subr.mxu0 0.0
        %433 = vmatpush1.msra.mxu0 0.0
        %434 = vmatprep.subr.mxu0 0.0
        %435 = vmatpush1.msra.mxu0 0.0
        %436 = vmatprep.subr.mxu0 0.0
        %437 = vmatpush1.msra.mxu0 0.0
        %438 = vmatprep.subr.mxu0 0.0
        %439 = vmatpush1.msra.mxu0 0.0
        %440 = vmatprep.subr.mxu0 0.0
        %441 = vmatpush1.msra.mxu0 0.0
        %442 = vmatprep.subr.mxu0 0.0
        %443 = vmatpush1.msra.mxu0 0.0
        %444 = vmatprep.subr.mxu0 0.0
        %445 = vmatpush1.msra.mxu0 0.0
        %446 = vmatprep.subr.mxu0 0.0
        %447 = vmatpush1.msra.mxu0 0.0
        %448 = vmatprep.subr.mxu0 0.0
        %449 = vmatpush1.msra.mxu0 0.0
        %450 = vmatprep.subr.mxu0 0.0
        %451 = vmatpush1.msra.mxu0 0.0
        %452 = vmatprep.mubr.f32.mxu0 0.0
        %453 = vmatmul.mubr.f32.gmra.mrb[0].mxu0 %v340
        %v454 = vpop.f32.mrb[0].mxu0
        %v455 = vadd.f32 %v386, %v454
        %v456 = vpop.f32.mrb[0].mxu0
        %457 = vmatprep.mubr.f32.mxu0 0.0
        %458 = vmatmul.mubr.f32.gmra.mrb[0].mxu0 %v341
        %v459 = vpop.f32.mrb[0].mxu0
        %v460 = vadd.f32 %v386, %v459
        %v461 = vpop.f32.mrb[0].mxu0
        %462 = vmatprep.mubr.f32.mxu0 0.0
        %463 = vmatmul.mubr.f32.gmra.mrb[0].mxu0 %v342
        %v464 = vpop.f32.mrb[0].mxu0
        %v465 = vadd.f32 %v386, %v464
        %v466 = vpop.f32.mrb[0].mxu0
        %467 = vmatprep.mubr.f32.mxu0 0.0
        %468 = vmatmul.mubr.f32.gmra.mrb[0].mxu0 %v343
        %v469 = vpop.f32.mrb[0].mxu0
        %v470 = vadd.f32 %v386, %v469
        %v471 = vpop.f32.mrb[0].mxu0
        %472 = vmatprep.mubr.f32.mxu0 0.0
        %473 = vmatmul.mubr.f32.gmra.mrb[0].mxu0 %v344
        %v474 = vpop.f32.mrb[0].mxu0
        %v475 = vadd.f32 %v386, %v474
        %v476 = vpop.f32.mrb[0].mxu0
        %477 = vmatprep.mubr.f32.mxu0 0.0
        %478 = vmatmul.mubr.f32.gmra.mrb[0].mxu0 %v345
        %v479 = vpop.f32.mrb[0].mxu0
        %v480 = vadd.f32 %v386, %v479
        %v481 = vpop.f32.mrb[0].mxu0
        %482 = vmatprep.mubr.f32.mxu0 0.0
        %483 = vmatmul.mubr.f32.gmra.mrb[0].mxu0 %v346
        %v484 = vpop.f32.mrb[0].mxu0
        %v485 = vadd.f32 %v386, %v484
        %v486 = vpop.f32.mrb[0].mxu0
        %487 = vmatprep.mubr.f32.mxu0 0.0
        %488 = vmatmul.mubr.f32.gmra.mrb[0].mxu0 %v347
        %v489 = vpop.f32.mrb[0].mxu0
        %v490 = vadd.f32 %v386, %v489
        %v491 = vpop.f32.mrb[0].mxu0
        %492 = vmatprep.mubr.f32.mxu0 0.0
        %493 = vmatmul.mubr.f32.gmra.mrb[0].mxu0 %v348
        %v494 = vpop.f32.mrb[0].mxu0
        %v495 = vadd.f32 %v386, %v494
        %v496 = vpop.f32.mrb[0].mxu0
        %497 = vmatprep.mubr.f32.mxu0 0.0
        %498 = vmatmul.mubr.f32.gmra.mrb[0].mxu0 %v349
        %v499 = vpop.f32.mrb[0].mxu0
        %v500 = vadd.f32 %v386, %v499
        %v501 = vpop.f32.mrb[0].mxu0
        %502 = vmatprep.mubr.f32.mxu0 0.0
        %503 = vmatmul.mubr.f32.gmra.mrb[0].mxu0 %v350
        %v504 = vpop.f32.mrb[0].mxu0
        %v505 = vadd.f32 %v386, %v504
        %v506 = vpop.f32.mrb[0].mxu0
        %507 = vmatprep.mubr.f32.mxu0 0.0
        %508 = vmatmul.mubr.f32.gmra.mrb[0].mxu0 %v351
        %v509 = vpop.f32.mrb[0].mxu0
        %v510 = vadd.f32 %v386, %v509
        %v511 = vpop.f32.mrb[0].mxu0
        %512 = vmatprep.mubr.f32.mxu0 0.0
        %513 = vmatmul.mubr.f32.gmra.mrb[0].mxu0 %v352
        %v514 = vpop.f32.mrb[0].mxu0
        %v515 = vadd.f32 %v386, %v514
        %v516 = vpop.f32.mrb[0].mxu0
        %517 = vmatprep.mubr.f32.mxu0 0.0
        %518 = vmatmul.mubr.f32.gmra.mrb[0].mxu0 %v353
        %v519 = vpop.f32.mrb[0].mxu0
        %v520 = vadd.f32 %v386, %v519
        %v521 = vpop.f32.mrb[0].mxu0
        %522 = vmatprep.mubr.f32.mxu0 0.0
        %523 = vmatmul.mubr.f32.gmra.mrb[0].mxu0 %v354
        %v524 = vpop.f32.mrb[0].mxu0
        %v525 = vadd.f32 %v386, %v524
        %v526 = vpop.f32.mrb[0].mxu0
        %527 = vmatprep.mubr.f32.mxu0 0.0
        %528 = vmatmul.mubr.f32.gmra.mrb[0].mxu0 %v355
        %v529 = vpop.f32.mrb[0].mxu0
        %v530 = vadd.f32 %v386, %v529
        %v531 = vpop.f32.mrb[0].mxu0
        %532 = vmatprep.mubr.f32.mxu0 0.0
        %533 = vmatmul.mubr.f32.gmra.mrb[0].mxu0 %v356
        %v534 = vpop.f32.mrb[0].mxu0
        %v535 = vadd.f32 %v386, %v534
        %v536 = vpop.f32.mrb[0].mxu0
        %537 = vmatprep.mubr.f32.mxu0 0.0
        %538 = vmatmul.mubr.f32.gmra.mrb[0].mxu0 %v357
        %v539 = vpop.f32.mrb[0].mxu0
        %v540 = vadd.f32 %v386, %v539
        %v541 = vpop.f32.mrb[0].mxu0
        %542 = vmatprep.mubr.f32.mxu0 0.0
        %543 = vmatmul.mubr.f32.gmra.mrb[0].mxu0 %v358
        %v544 = vpop.f32.mrb[0].mxu0
        %v545 = vadd.f32 %v386, %v544
        %v546 = vpop.f32.mrb[0].mxu0
        %547 = vmatprep.mubr.f32.mxu0 0.0
        %548 = vmatmul.mubr.f32.gmra.mrb[0].mxu0 %v359
        %v549 = vpop.f32.mrb[0].mxu0
        %v550 = vadd.f32 %v386, %v549
        %v551 = vpop.f32.mrb[0].mxu0
        %552 = vmatprep.mubr.f32.mxu0 0.0
        %553 = vmatmul.mubr.f32.gmra.mrb[0].mxu0 %v360
        %v554 = vpop.f32.mrb[0].mxu0
        %v555 = vadd.f32 %v386, %v554
        %v556 = vpop.f32.mrb[0].mxu0
        %557 = vmatprep.mubr.f32.mxu0 0.0
        %558 = vmatmul.mubr.f32.gmra.mrb[0].mxu0 %v361
        %v559 = vpop.f32.mrb[0].mxu0
        %v560 = vadd.f32 %v386, %v559
        %v561 = vpop.f32.mrb[0].mxu0
        %562 = vmatprep.mubr.f32.mxu0 0.0
        %563 = vmatmul.mubr.f32.gmra.mrb[0].mxu0 %v362
        %v564 = vpop.f32.mrb[0].mxu0
        %v565 = vadd.f32 %v386, %v564
        %v566 = vpop.f32.mrb[0].mxu0
        %567 = vmatprep.mubr.f32.mxu0 0.0
        %568 = vmatmul.mubr.f32.gmra.mrb[0].mxu0 %v363
        %v569 = vpop.f32.mrb[0].mxu0
        %v570 = vadd.f32 %v386, %v569
        %v571 = vpop.f32.mrb[0].mxu0
        %572 = vmatprep.mubr.f32.mxu0 0.0
        %573 = vmatmul.mubr.f32.gmra.mrb[0].mxu0 %v364
        %v574 = vpop.f32.mrb[0].mxu0
        %v575 = vadd.f32 %v386, %v574
        %v576 = vpop.f32.mrb[0].mxu0
        %577 = vdwg.mxu0
        %v578 = vmul.f32 %v455, 0.5
        %v579 = vmul.f32 %v460, 0.5
        %v580 = vmul.f32 %v465, 0.5
        %v581 = vmul.f32 %v470, 0.5
        %v582 = vmul.f32 %v475, 0.5
        %v583 = vmul.f32 %v480, 0.5
        %v584 = vmul.f32 %v485, 0.5
        %v585 = vmul.f32 %v490, 0.5
        %v586 = vmul.f32 %v495, 0.5
        %v587 = vmul.f32 %v500, 0.5
        %v588 = vmul.f32 %v505, 0.5
        %v589 = vmul.f32 %v510, 0.5
        %v590 = vmul.f32 %v515, 0.5
        %v591 = vmul.f32 %v520, 0.5
        %v592 = vmul.f32 %v525, 0.5
        %v593 = vmul.f32 %v530, 0.5
        %v594 = vmul.f32 %v535, 0.5
        %v595 = vmul.f32 %v540, 0.5
        %v596 = vmul.f32 %v545, 0.5
        %v597 = vmul.f32 %v550, 0.5
        %v598 = vmul.f32 %v555, 0.5
        %v599 = vmul.f32 %v560, 0.5
        %v600 = vmul.f32 %v565, 0.5
        %v601 = vmul.f32 %v570, 0.5
        %v602 = vmul.f32 %v575, 0.5
        %v603 = vmul.f32 %v455, 0.70710677
        %v604 = vmul.f32 %v460, 0.70710677
        %v605 = vmul.f32 %v465, 0.70710677
        %v606 = vmul.f32 %v470, 0.70710677
        %v607 = vmul.f32 %v475, 0.70710677
        %v608 = vmul.f32 %v480, 0.70710677
        %v609 = vmul.f32 %v485, 0.70710677
        %v610 = vmul.f32 %v490, 0.70710677
        %v611 = vmul.f32 %v495, 0.70710677
        %v612 = vmul.f32 %v500, 0.70710677
        %v613 = vmul.f32 %v505, 0.70710677
        %v614 = vmul.f32 %v510, 0.70710677
        %v615 = vmul.f32 %v515, 0.70710677
        %v616 = vmul.f32 %v520, 0.70710677
        %v617 = vmul.f32 %v525, 0.70710677
        %v618 = vmul.f32 %v530, 0.70710677
        %v619 = vmul.f32 %v535, 0.70710677
        %v620 = vmul.f32 %v540, 0.70710677
        %v621 = vmul.f32 %v545, 0.70710677
        %v622 = vmul.f32 %v550, 0.70710677
        %v623 = vmul.f32 %v555, 0.70710677
        %v624 = vmul.f32 %v560, 0.70710677
        %v625 = vmul.f32 %v565, 0.70710677
        %v626 = vmul.f32 %v570, 0.70710677
        %v627 = vmul.f32 %v575, 0.70710677
        %v628 = verf.f32.pop %v603
        %v629 = verf.f32.pop %v604
        %v630 = verf.f32.pop %v605
        %v631 = verf.f32.pop %v606
        %v632 = verf.f32.pop %v607
        %v633 = verf.f32.pop %v608
        %v634 = verf.f32.pop %v609
        %v635 = verf.f32.pop %v610
        %v636 = verf.f32.pop %v611
        %v637 = verf.f32.pop %v612
        %v638 = verf.f32.pop %v613
        %v639 = verf.f32.pop %v614
        %v640 = verf.f32.pop %v615
        %v641 = verf.f32.pop %v616
        %v642 = verf.f32.pop %v617
        %v643 = verf.f32.pop %v618
        %v644 = verf.f32.pop %v619
        %v645 = verf.f32.pop %v620
        %v646 = verf.f32.pop %v621
        %v647 = verf.f32.pop %v622
        %v648 = verf.f32.pop %v623
        %v649 = verf.f32.pop %v624
        %v650 = verf.f32.pop %v625
        %v651 = verf.f32.pop %v626
        %v652 = verf.f32.pop %v627
        %v653 = vadd.f32 %v628, 1.0
        %v654 = vadd.f32 %v629, 1.0
        %v655 = vadd.f32 %v630, 1.0
        %v656 = vadd.f32 %v631, 1.0
        %v657 = vadd.f32 %v632, 1.0
        %v658 = vadd.f32 %v633, 1.0
        %v659 = vadd.f32 %v634, 1.0
        %v660 = vadd.f32 %v635, 1.0
        %v661 = vadd.f32 %v636, 1.0
        %v662 = vadd.f32 %v637, 1.0
        %v663 = vadd.f32 %v638, 1.0
        %v664 = vadd.f32 %v639, 1.0
        %v665 = vadd.f32 %v640, 1.0
        %v666 = vadd.f32 %v641, 1.0
        %v667 = vadd.f32 %v642, 1.0
        %v668 = vadd.f32 %v643, 1.0
        %v669 = vadd.f32 %v644, 1.0
        %v670 = vadd.f32 %v645, 1.0
        %v671 = vadd.f32 %v646, 1.0
        %v672 = vadd.f32 %v647, 1.0
        %v673 = vadd.f32 %v648, 1.0
        %v674 = vadd.f32 %v649, 1.0
        %v675 = vadd.f32 %v650, 1.0
        %v676 = vadd.f32 %v651, 1.0
        %v677 = vadd.f32 %v652, 1.0
        %v678 = vmul.f32 %v578, %v653
        %v679 = vmul.f32 %v579, %v654
        %v680 = vmul.f32 %v580, %v655
        %v681 = vmul.f32 %v581, %v656
        %v682 = vmul.f32 %v582, %v657
        %v683 = vmul.f32 %v583, %v658
        %v684 = vmul.f32 %v584, %v659
        %v685 = vmul.f32 %v585, %v660
        %v686 = vmul.f32 %v586, %v661
        %v687 = vmul.f32 %v587, %v662
        %v688 = vmul.f32 %v588, %v663
        %v689 = vmul.f32 %v589, %v664
        %v690 = vmul.f32 %v590, %v665
        %v691 = vmul.f32 %v591, %v666
        %v692 = vmul.f32 %v592, %v667
        %v693 = vmul.f32 %v593, %v668
        %v694 = vmul.f32 %v594, %v669
        %v695 = vmul.f32 %v595, %v670
        %v696 = vmul.f32 %v596, %v671
        %v697 = vmul.f32 %v597, %v672
        %v698 = vmul.f32 %v598, %v673
        %v699 = vmul.f32 %v599, %v674
        %v700 = vmul.f32 %v600, %v675
        %v701 = vmul.f32 %v601, %v676
        %v702 = vmul.f32 %v602, %v677
        %v703 = vld [vmem:[#allocation2] sm:$0xff]
        %v704 = vld [vmem:[#allocation2 + $0x8] sm:$0xff]
        %v705 = vld [vmem:[#allocation2 + $0x10] sm:$0xff]
        %v706 = vld [vmem:[#allocation2 + $0x18] sm:$0xff]
        %v707 = vld [vmem:[#allocation2 + $0x20] sm:$0xff]
        %v708 = vld [vmem:[#allocation2 + $0x28] sm:$0xff]
        %v709 = vld [vmem:[#allocation2 + $0x30] sm:$0xff]
        %v710 = vld [vmem:[#allocation2 + $0x38] sm:$0xff]
        %v711 = vld [vmem:[#allocation2 + $0x40] sm:$0xff]
        %v712 = vld [vmem:[#allocation2 + $0x48] sm:$0xff]
        %v713 = vld [vmem:[#allocation2 + $0x50] sm:$0xff]
        %v714 = vld [vmem:[#allocation2 + $0x58] sm:$0xff]
        %v715 = vld [vmem:[#allocation2 + $0x60] sm:$0xff]
        %v716 = vld [vmem:[#allocation2 + $0x68] sm:$0xff]
        %v717 = vld [vmem:[#allocation2 + $0x70] sm:$0xff]
        %v718 = vld [vmem:[#allocation2 + $0x78] sm:$0xff]
        %v719 = vld [vmem:[#allocation2 + $0x80] sm:$0xff]
        %v720 = vld [vmem:[#allocation2 + $0x88] sm:$0xff]
        %v721 = vld [vmem:[#allocation2 + $0x90] sm:$0xff]
        %v722 = vld [vmem:[#allocation2 + $0x98] sm:$0xff]
        %v723 = vld [vmem:[#allocation2 + $0xa0] sm:$0xff]
        %v724 = vld [vmem:[#allocation2 + $0xa8] sm:$0xff]
        %v725 = vld [vmem:[#allocation2 + $0xb0] sm:$0xff]
        %v726 = vld [vmem:[#allocation2 + $0xb8] sm:$0xff]
        %v727 = vld [vmem:[#allocation2 + $0xc0] sm:$0xff]
        %v728 = vld [vmem:[%s304] sm:$0xff]
        %v729 = vld [vmem:[%s304 + $0x8] sm:$0xff]
        %v730 = vld [vmem:[%s304 + $0x10] sm:$0xff]
        %v731 = vld [vmem:[%s304 + $0x18] sm:$0xff]
        %v732 = vld [vmem:[%s304 + $0x20] sm:$0xff]
        %v733 = vld [vmem:[%s304 + $0x28] sm:$0xff]
        %v734 = vld [vmem:[%s304 + $0x30] sm:$0xff]
        %v735 = vld [vmem:[%s304 + $0x38] sm:$0xff]
        %v736 = vld [vmem:[%s304 + $0x40] sm:$0xff]
        %v737 = vld [vmem:[%s304 + $0x48] sm:$0xff]
        %v738 = vld [vmem:[%s304 + $0x50] sm:$0xff]
        %v739 = vld [vmem:[%s304 + $0x58] sm:$0xff]
        %v740 = vld [vmem:[%s304 + $0x60] sm:$0xff]
        %v741 = vld [vmem:[%s304 + $0x68] sm:$0xff]
        %v742 = vld [vmem:[%s304 + $0x70] sm:$0xff]
        %v743 = vld [vmem:[%s304 + $0x78] sm:$0xff]
        %744 = vmatprep.subr.mxu0 0.0
        %745 = vmatpush1.msra.mxu0 %v728
        %746 = vmatprep.subr.mxu0 0.0
        %747 = vmatpush1.msra.mxu0 %v729
        %748 = vmatprep.subr.mxu0 0.0
        %749 = vmatpush1.msra.mxu0 %v730
        %750 = vmatprep.subr.mxu0 0.0
        %751 = vmatpush1.msra.mxu0 %v731
        %752 = vmatprep.subr.mxu0 0.0
        %753 = vmatpush1.msra.mxu0 %v732
        %754 = vmatprep.subr.mxu0 0.0
        %755 = vmatpush1.msra.mxu0 %v733
        %756 = vmatprep.subr.mxu0 0.0
        %757 = vmatpush1.msra.mxu0 %v734
        %758 = vmatprep.subr.mxu0 0.0
        %759 = vmatpush1.msra.mxu0 %v735
        %760 = vmatprep.subr.mxu0 0.0
        %761 = vmatpush1.msra.mxu0 %v736
        %762 = vmatprep.subr.mxu0 0.0
        %763 = vmatpush1.msra.mxu0 %v737
        %764 = vmatprep.subr.mxu0 0.0
        %765 = vmatpush1.msra.mxu0 %v738
        %766 = vmatprep.subr.mxu0 0.0
        %767 = vmatpush1.msra.mxu0 %v739
        %768 = vmatprep.subr.mxu0 0.0
        %769 = vmatpush1.msra.mxu0 %v740
        %770 = vmatprep.subr.mxu0 0.0
        %771 = vmatpush1.msra.mxu0 %v741
        %772 = vmatprep.subr.mxu0 0.0
        %773 = vmatpush1.msra.mxu0 %v742
        %774 = vmatprep.subr.mxu0 0.0
        %775 = vmatpush1.msra.mxu0 %v743
        %776 = vmatprep.subr.mxu0 0.0
        %777 = vmatpush1.msra.mxu0 0.0
        %778 = vmatprep.subr.mxu0 0.0
        %779 = vmatpush1.msra.mxu0 0.0
        %780 = vmatprep.subr.mxu0 0.0
        %781 = vmatpush1.msra.mxu0 0.0
        %782 = vmatprep.subr.mxu0 0.0
        %783 = vmatpush1.msra.mxu0 0.0
        %784 = vmatprep.subr.mxu0 0.0
        %785 = vmatpush1.msra.mxu0 0.0
        %786 = vmatprep.subr.mxu0 0.0
        %787 = vmatpush1.msra.mxu0 0.0
        %788 = vmatprep.subr.mxu0 0.0
        %789 = vmatpush1.msra.mxu0 0.0
        %790 = vmatprep.subr.mxu0 0.0
        %791 = vmatpush1.msra.mxu0 0.0
        %792 = vmatprep.subr.mxu0 0.0
        %793 = vmatpush1.msra.mxu0 0.0
        %794 = vmatprep.subr.mxu0 0.0
        %795 = vmatpush1.msra.mxu0 0.0
        %796 = vmatprep.subr.mxu0 0.0
        %797 = vmatpush1.msra.mxu0 0.0
        %798 = vmatprep.subr.mxu0 0.0
        %799 = vmatpush1.msra.mxu0 0.0
        %800 = vmatprep.subr.mxu0 0.0
        %801 = vmatpush1.msra.mxu0 0.0
        %802 = vmatprep.subr.mxu0 0.0
        %803 = vmatpush1.msra.mxu0 0.0
        %804 = vmatprep.subr.mxu0 0.0
        %805 = vmatpush1.msra.mxu0 0.0
        %806 = vmatprep.subr.mxu0 0.0
        %807 = vmatpush1.msra.mxu0 0.0
        %808 = vmatprep.mubr.f32.mxu0 0.0
        %809 = vmatmul.mubr.f32.gmra.mrb[0].mxu0 %v678
        %v810 = vpop.f32.mrb[0].mxu0
        %v811 = vadd.f32 0.0, %v810
        %v812 = vpop.f32.mrb[0].mxu0
        %813 = vmatprep.mubr.f32.mxu0 0.0
        %814 = vmatmul.mubr.f32.gmra.mrb[0].mxu0 %v679
        %v815 = vpop.f32.mrb[0].mxu0
        %v816 = vadd.f32 0.0, %v815
        %v817 = vpop.f32.mrb[0].mxu0
        %818 = vmatprep.mubr.f32.mxu0 0.0
        %819 = vmatmul.mubr.f32.gmra.mrb[0].mxu0 %v680
        %v820 = vpop.f32.mrb[0].mxu0
        %v821 = vadd.f32 0.0, %v820
        %v822 = vpop.f32.mrb[0].mxu0
        %823 = vmatprep.mubr.f32.mxu0 0.0
        %824 = vmatmul.mubr.f32.gmra.mrb[0].mxu0 %v681
        %v825 = vpop.f32.mrb[0].mxu0
        %v826 = vadd.f32 0.0, %v825
        %v827 = vpop.f32.mrb[0].mxu0
        %828 = vmatprep.mubr.f32.mxu0 0.0
        %829 = vmatmul.mubr.f32.gmra.mrb[0].mxu0 %v682
        %v830 = vpop.f32.mrb[0].mxu0
        %v831 = vadd.f32 0.0, %v830
        %v832 = vpop.f32.mrb[0].mxu0
        %833 = vmatprep.mubr.f32.mxu0 0.0
        %834 = vmatmul.mubr.f32.gmra.mrb[0].mxu0 %v683
        %v835 = vpop.f32.mrb[0].mxu0
        %v836 = vadd.f32 0.0, %v835
        %v837 = vpop.f32.mrb[0].mxu0
        %838 = vmatprep.mubr.f32.mxu0 0.0
        %839 = vmatmul.mubr.f32.gmra.mrb[0].mxu0 %v684
        %v840 = vpop.f32.mrb[0].mxu0
        %v841 = vadd.f32 0.0, %v840
        %v842 = vpop.f32.mrb[0].mxu0
        %843 = vmatprep.mubr.f32.mxu0 0.0
        %844 = vmatmul.mubr.f32.gmra.mrb[0].mxu0 %v685
        %v845 = vpop.f32.mrb[0].mxu0
        %v846 = vadd.f32 0.0, %v845
        %v847 = vpop.f32.mrb[0].mxu0
        %848 = vmatprep.mubr.f32.mxu0 0.0
        %849 = vmatmul.mubr.f32.gmra.mrb[0].mxu0 %v686
        %v850 = vpop.f32.mrb[0].mxu0
        %v851 = vadd.f32 0.0, %v850
        %v852 = vpop.f32.mrb[0].mxu0
        %853 = vmatprep.mubr.f32.mxu0 0.0
        %854 = vmatmul.mubr.f32.gmra.mrb[0].mxu0 %v687
        %v855 = vpop.f32.mrb[0].mxu0
        %v856 = vadd.f32 0.0, %v855
        %v857 = vpop.f32.mrb[0].mxu0
        %858 = vmatprep.mubr.f32.mxu0 0.0
        %859 = vmatmul.mubr.f32.gmra.mrb[0].mxu0 %v688
        %v860 = vpop.f32.mrb[0].mxu0
        %v861 = vadd.f32 0.0, %v860
        %v862 = vpop.f32.mrb[0].mxu0
        %863 = vmatprep.mubr.f32.mxu0 0.0
        %864 = vmatmul.mubr.f32.gmra.mrb[0].mxu0 %v689
        %v865 = vpop.f32.mrb[0].mxu0
        %v866 = vadd.f32 0.0, %v865
        %v867 = vpop.f32.mrb[0].mxu0
        %868 = vmatprep.mubr.f32.mxu0 0.0
        %869 = vmatmul.mubr.f32.gmra.mrb[0].mxu0 %v690
        %v870 = vpop.f32.mrb[0].mxu0
        %v871 = vadd.f32 0.0, %v870
        %v872 = vpop.f32.mrb[0].mxu0
        %873 = vmatprep.mubr.f32.mxu0 0.0
        %874 = vmatmul.mubr.f32.gmra.mrb[0].mxu0 %v691
        %v875 = vpop.f32.mrb[0].mxu0
        %v876 = vadd.f32 0.0, %v875
        %v877 = vpop.f32.mrb[0].mxu0
        %878 = vmatprep.mubr.f32.mxu0 0.0
        %879 = vmatmul.mubr.f32.gmra.mrb[0].mxu0 %v692
        %v880 = vpop.f32.mrb[0].mxu0
        %v881 = vadd.f32 0.0, %v880
        %v882 = vpop.f32.mrb[0].mxu0
        %883 = vmatprep.mubr.f32.mxu0 0.0
        %884 = vmatmul.mubr.f32.gmra.mrb[0].mxu0 %v693
        %v885 = vpop.f32.mrb[0].mxu0
        %v886 = vadd.f32 0.0, %v885
        %v887 = vpop.f32.mrb[0].mxu0
        %888 = vmatprep.mubr.f32.mxu0 0.0
        %889 = vmatmul.mubr.f32.gmra.mrb[0].mxu0 %v694
        %v890 = vpop.f32.mrb[0].mxu0
        %v891 = vadd.f32 0.0, %v890
        %v892 = vpop.f32.mrb[0].mxu0
        %893 = vmatprep.mubr.f32.mxu0 0.0
        %894 = vmatmul.mubr.f32.gmra.mrb[0].mxu0 %v695
        %v895 = vpop.f32.mrb[0].mxu0
        %v896 = vadd.f32 0.0, %v895
        %v897 = vpop.f32.mrb[0].mxu0
        %898 = vmatprep.mubr.f32.mxu0 0.0
        %899 = vmatmul.mubr.f32.gmra.mrb[0].mxu0 %v696
        %v900 = vpop.f32.mrb[0].mxu0
        %v901 = vadd.f32 0.0, %v900
        %v902 = vpop.f32.mrb[0].mxu0
        %903 = vmatprep.mubr.f32.mxu0 0.0
        %904 = vmatmul.mubr.f32.gmra.mrb[0].mxu0 %v697
        %v905 = vpop.f32.mrb[0].mxu0
        %v906 = vadd.f32 0.0, %v905
        %v907 = vpop.f32.mrb[0].mxu0
        %908 = vmatprep.mubr.f32.mxu0 0.0
        %909 = vmatmul.mubr.f32.gmra.mrb[0].mxu0 %v698
        %v910 = vpop.f32.mrb[0].mxu0
        %v911 = vadd.f32 0.0, %v910
        %v912 = vpop.f32.mrb[0].mxu0
        %913 = vmatprep.mubr.f32.mxu0 0.0
        %914 = vmatmul.mubr.f32.gmra.mrb[0].mxu0 %v699
        %v915 = vpop.f32.mrb[0].mxu0
        %v916 = vadd.f32 0.0, %v915
        %v917 = vpop.f32.mrb[0].mxu0
        %918 = vmatprep.mubr.f32.mxu0 0.0
        %919 = vmatmul.mubr.f32.gmra.mrb[0].mxu0 %v700
        %v920 = vpop.f32.mrb[0].mxu0
        %v921 = vadd.f32 0.0, %v920
        %v922 = vpop.f32.mrb[0].mxu0
        %923 = vmatprep.mubr.f32.mxu0 0.0
        %924 = vmatmul.mubr.f32.gmra.mrb[0].mxu0 %v701
        %v925 = vpop.f32.mrb[0].mxu0
        %v926 = vadd.f32 0.0, %v925
        %v927 = vpop.f32.mrb[0].mxu0
        %928 = vmatprep.mubr.f32.mxu0 0.0
        %929 = vmatmul.mubr.f32.gmra.mrb[0].mxu0 %v702
        %v930 = vpop.f32.mrb[0].mxu0
        %v931 = vadd.f32 0.0, %v930
        %v932 = vpop.f32.mrb[0].mxu0
        %933 = vdwg.mxu0
        %v934 = vadd.f32 %v703, %v811
        %v935 = vadd.f32 %v704, %v816
        %v936 = vadd.f32 %v705, %v821
        %v937 = vadd.f32 %v706, %v826
        %v938 = vadd.f32 %v707, %v831
        %v939 = vadd.f32 %v708, %v836
        %v940 = vadd.f32 %v709, %v841
        %v941 = vadd.f32 %v710, %v846
        %v942 = vadd.f32 %v711, %v851
        %v943 = vadd.f32 %v712, %v856
        %v944 = vadd.f32 %v713, %v861
        %v945 = vadd.f32 %v714, %v866
        %v946 = vadd.f32 %v715, %v871
        %v947 = vadd.f32 %v716, %v876
        %v948 = vadd.f32 %v717, %v881
        %v949 = vadd.f32 %v718, %v886
        %v950 = vadd.f32 %v719, %v891
        %v951 = vadd.f32 %v720, %v896
        %v952 = vadd.f32 %v721, %v901
        %v953 = vadd.f32 %v722, %v906
        %v954 = vadd.f32 %v723, %v911
        %v955 = vadd.f32 %v724, %v916
        %v956 = vadd.f32 %v725, %v921
        %v957 = vadd.f32 %v726, %v926
        %v958 = vadd.f32 %v727, %v931
        %959 = vst [vmem:[#allocation2] sm:$0xff] %v934
        %960 = vst [vmem:[#allocation2 + $0x8] sm:$0xff] %v935
        %961 = vst [vmem:[#allocation2 + $0x10] sm:$0xff] %v936
        %962 = vst [vmem:[#allocation2 + $0x18] sm:$0xff] %v937
        %963 = vst [vmem:[#allocation2 + $0x20] sm:$0xff] %v938
        %964 = vst [vmem:[#allocation2 + $0x28] sm:$0xff] %v939
        %965 = vst [vmem:[#allocation2 + $0x30] sm:$0xff] %v940
        %966 = vst [vmem:[#allocation2 + $0x38] sm:$0xff] %v941
        %967 = vst [vmem:[#allocation2 + $0x40] sm:$0xff] %v942
        %968 = vst [vmem:[#allocation2 + $0x48] sm:$0xff] %v943
        %969 = vst [vmem:[#allocation2 + $0x50] sm:$0xff] %v944
        %970 = vst [vmem:[#allocation2 + $0x58] sm:$0xff] %v945
        %971 = vst [vmem:[#allocation2 + $0x60] sm:$0xff] %v946
        %972 = vst [vmem:[#allocation2 + $0x68] sm:$0xff] %v947
        %973 = vst [vmem:[#allocation2 + $0x70] sm:$0xff] %v948
        %974 = vst [vmem:[#allocation2 + $0x78] sm:$0xff] %v949
        %975 = vst [vmem:[#allocation2 + $0x80] sm:$0xff] %v950
        %976 = vst [vmem:[#allocation2 + $0x88] sm:$0xff] %v951
        %977 = vst [vmem:[#allocation2 + $0x90] sm:$0xff] %v952
        %978 = vst [vmem:[#allocation2 + $0x98] sm:$0xff] %v953
        %979 = vst [vmem:[#allocation2 + $0xa0] sm:$0xff] %v954
        %980 = vst [vmem:[#allocation2 + $0xa8] sm:$0xff] %v955
        %981 = vst [vmem:[#allocation2 + $0xb0] sm:$0xff] %v956
        %982 = vst [vmem:[#allocation2 + $0xb8] sm:$0xff] %v957
        %983 = vst [vmem:[#allocation2 + $0xc0] sm:$0xff] %v958
        // Predicated region
        $region45: #{mlp_block.1} parent=39 // pred_check
          %p984 = pneg %p311
        $region46: #{mlp_block.1} parent=39 // pred_check_branch
          %986 = sbr.rel (%p984) target = $region48
        $region47: #{mlp_block.1} parent=39 // pred_region
          %v987 = vld [vmem:[#allocation2] sm:$0xff]
          %v988 = vld [vmem:[#allocation2 + $0x8] sm:$0xff]
          %v989 = vld [vmem:[#allocation2 + $0x10] sm:$0xff]
          %v990 = vld [vmem:[#allocation2 + $0x18] sm:$0xff]
          %v991 = vld [vmem:[#allocation2 + $0x20] sm:$0xff]
          %v992 = vld [vmem:[#allocation2 + $0x28] sm:$0xff]
          %v993 = vld [vmem:[#allocation2 + $0x30] sm:$0xff]
          %v994 = vld [vmem:[#allocation2 + $0x38] sm:$0xff]
          %v995 = vld [vmem:[#allocation2 + $0x40] sm:$0xff]
          %v996 = vld [vmem:[#allocation2 + $0x48] sm:$0xff]
          %v997 = vld [vmem:[#allocation2 + $0x50] sm:$0xff]
          %v998 = vld [vmem:[#allocation2 + $0x58] sm:$0xff]
          %v999 = vld [vmem:[#allocation2 + $0x60] sm:$0xff]
          %v1000 = vld [vmem:[#allocation2 + $0x68] sm:$0xff]
          %v1001 = vld [vmem:[#allocation2 + $0x70] sm:$0xff]
          %v1002 = vld [vmem:[#allocation2 + $0x78] sm:$0xff]
          %v1003 = vld [vmem:[#allocation2 + $0x80] sm:$0xff]
          %v1004 = vld [vmem:[#allocation2 + $0x88] sm:$0xff]
          %v1005 = vld [vmem:[#allocation2 + $0x90] sm:$0xff]
          %v1006 = vld [vmem:[#allocation2 + $0x98] sm:$0xff]
          %v1007 = vld [vmem:[#allocation2 + $0xa0] sm:$0xff]
          %v1008 = vld [vmem:[#allocation2 + $0xa8] sm:$0xff]
          %v1009 = vld [vmem:[#allocation2 + $0xb0] sm:$0xff]
          %v1010 = vld [vmem:[#allocation2 + $0xb8] sm:$0xff]
          %v1011 = vld [vmem:[#allocation2 + $0xc0] sm:$0xff]
          %v1012 = vld [vmem:[%s4] sm:$0x1]
          %v1014 = vlaneseq
          %v1015 = vshrl.u32 %v1014, 7
          %v1016 = vsub.s32 0, %v1015
          %v1017 = vrot.slane %v1012, %v1016
          %v1019 = vadd.f32 %v987, %v1017
          %v1020 = vadd.f32 %v988, %v1017
          %v1021 = vadd.f32 %v989, %v1017
          %v1022 = vadd.f32 %v990, %v1017
          %v1023 = vadd.f32 %v991, %v1017
          %v1024 = vadd.f32 %v992, %v1017
          %v1025 = vadd.f32 %v993, %v1017
          %v1026 = vadd.f32 %v994, %v1017
          %v1027 = vadd.f32 %v995, %v1017
          %v1028 = vadd.f32 %v996, %v1017
          %v1029 = vadd.f32 %v997, %v1017
          %v1030 = vadd.f32 %v998, %v1017
          %v1031 = vadd.f32 %v999, %v1017
          %v1032 = vadd.f32 %v1000, %v1017
          %v1033 = vadd.f32 %v1001, %v1017
          %v1034 = vadd.f32 %v1002, %v1017
          %v1035 = vadd.f32 %v1003, %v1017
          %v1036 = vadd.f32 %v1004, %v1017
          %v1037 = vadd.f32 %v1005, %v1017
          %v1038 = vadd.f32 %v1006, %v1017
          %v1039 = vadd.f32 %v1007, %v1017
          %v1040 = vadd.f32 %v1008, %v1017
          %v1041 = vadd.f32 %v1009, %v1017
          %v1042 = vadd.f32 %v1010, %v1017
          %v1043 = vadd.f32 %v1011, %v1017
          %1044 = vst [vmem:[%s278] sm:$0xff] %v1019
          %1045 = vst [vmem:[%s278 + $0x8] sm:$0xff] %v1020
          %1046 = vst [vmem:[%s278 + $0x10] sm:$0xff] %v1021
          %1047 = vst [vmem:[%s278 + $0x18] sm:$0xff] %v1022
          %1048 = vst [vmem:[%s278 + $0x20] sm:$0xff] %v1023
          %1049 = vst [vmem:[%s278 + $0x28] sm:$0xff] %v1024
          %1050 = vst [vmem:[%s278 + $0x30] sm:$0xff] %v1025
          %1051 = vst [vmem:[%s278 + $0x38] sm:$0xff] %v1026
          %1052 = vst [vmem:[%s278 + $0x40] sm:$0xff] %v1027
          %1053 = vst [vmem:[%s278 + $0x48] sm:$0xff] %v1028
          %1054 = vst [vmem:[%s278 + $0x50] sm:$0xff] %v1029
          %1055 = vst [vmem:[%s278 + $0x58] sm:$0xff] %v1030
          %1056 = vst [vmem:[%s278 + $0x60] sm:$0xff] %v1031
          %1057 = vst [vmem:[%s278 + $0x68] sm:$0xff] %v1032
          %1058 = vst [vmem:[%s278 + $0x70] sm:$0xff] %v1033
          %1059 = vst [vmem:[%s278 + $0x78] sm:$0xff] %v1034
          %1060 = vst [vmem:[%s278 + $0x80] sm:$0xff] %v1035
          %1061 = vst [vmem:[%s278 + $0x88] sm:$0xff] %v1036
          %1062 = vst [vmem:[%s278 + $0x90] sm:$0xff] %v1037
          %1063 = vst [vmem:[%s278 + $0x98] sm:$0xff] %v1038
          %1064 = vst [vmem:[%s278 + $0xa0] sm:$0xff] %v1039
          %1065 = vst [vmem:[%s278 + $0xa8] sm:$0xff] %v1040
          %1066 = vst [vmem:[%s278 + $0xb0] sm:$0xff] %v1041
          %1067 = vst [vmem:[%s278 + $0xb8] sm:$0xff] %v1042
          %1068 = vst [vmem:[%s278 + $0xc0] sm:$0xff] %v1043
        $region48: #{mlp_block.1} parent=39 // pred_fallthru
          _
        %s1069 = sand.u32 %s161, 1
        %s1070 = sand.u32 %s161, 1
        %s1071 = smul.addr %s1070, 200
        %s1072 = scalar_lea.vmem [#allocation3], %s1071
        // Predicated region
        $region49: #{mlp_block.1} parent=39 // pred_check
          %p1073 = pneg %p171
        $region50: #{mlp_block.1} parent=39 // pred_check_branch
          %1075 = sbr.rel (%p1073) target = $region52
        $region51: #{mlp_block.1} parent=39 // pred_region
          %s1076 = smul.u32 25, %s20
          %s1077 = ssub.s32 49, %s1076
          %p1078 = scmp.lt.s32.totalorder %s1077, 25
          %s1079 = scalar_select %p1078, %s1077, 25
          %s1080 = smul.u32 128, %s1079
          %p1081 = scmp.ne.s32.totalorder 0, %s1080
          %s1082 = smul.addr %s1076, 8
          %s1083 = scalar_lea.vmem %s5, %s1082
          // Predicated region
          $region53: #{mlp_block.1} parent=51 // pred_check
            %p1084 = pneg %p1081
          $region54: #{mlp_block.1} parent=51 // pred_check_branch
            %1086 = sbr.rel (%p1084) target = $region56
          $region55: #{mlp_block.1} parent=51 // pred_region
            // Predicated region
            $region57: #{mlp_block.1} parent=55 // pred_check
              _
            $region58: #{mlp_block.1} parent=55 // pred_check_branch
              %1088 = sbr.rel (0) target = $region60
            $region59: #{mlp_block.1} parent=55 // pred_region
              // Predicated region
              $region79: #{mlp_block.1} parent=59 // pred_check
                _
              $region80: #{mlp_block.1} parent=59 // pred_check_branch
                %1186 = sbr.rel (0) target = $region82
              $region81: #{mlp_block.1} parent=59 // pred_region
                %s1187 = sdiv.u32.pop %s1079, 25
                %s1188 = srem.u32.pop %s1079, 25
                // While loop
                $region83: #{mlp_block.1} parent=81 // loop_pre_header
                  _
                $region84: #{mlp_block.1} parent=81 // loop_header
                  %s1190 = sphi 0, %s1192
                  %p1191 = scmp.ge.s32.totalorder %s1190, %s1187
                  %s1195 = sphi 0, %s1250
                  %s1196 = sphi %s1072, %s1253
                  %s1197 = sphi %s1083, %s1254
                $region85: #{mlp_block.1} parent=81 // loop_header_branch
                  %1194 = sbr.rel (%p1191) target = $region89
                $region86: #{mlp_block.1} parent=81 // loop_body
                  %v1198 = vld [vmem:[%s1196] sm:$0xff]
                  %1199 = vst [vmem:[%s1197] sm:$0xff] %v1198
                  %v1200 = vld [vmem:[%s1196 + $0x8] sm:$0xff]
                  %1201 = vst [vmem:[%s1197 + $0x8] sm:$0xff] %v1200
                  %v1202 = vld [vmem:[%s1196 + $0x10] sm:$0xff]
                  %1203 = vst [vmem:[%s1197 + $0x10] sm:$0xff] %v1202
                  %v1204 = vld [vmem:[%s1196 + $0x18] sm:$0xff]
                  %1205 = vst [vmem:[%s1197 + $0x18] sm:$0xff] %v1204
                  %v1206 = vld [vmem:[%s1196 + $0x20] sm:$0xff]
                  %1207 = vst [vmem:[%s1197 + $0x20] sm:$0xff] %v1206
                  %v1208 = vld [vmem:[%s1196 + $0x28] sm:$0xff]
                  %1209 = vst [vmem:[%s1197 + $0x28] sm:$0xff] %v1208
                  %v1210 = vld [vmem:[%s1196 + $0x30] sm:$0xff]
                  %1211 = vst [vmem:[%s1197 + $0x30] sm:$0xff] %v1210
                  %v1212 = vld [vmem:[%s1196 + $0x38] sm:$0xff]
                  %1213 = vst [vmem:[%s1197 + $0x38] sm:$0xff] %v1212
                  %v1214 = vld [vmem:[%s1196 + $0x40] sm:$0xff]
                  %1215 = vst [vmem:[%s1197 + $0x40] sm:$0xff] %v1214
                  %v1216 = vld [vmem:[%s1196 + $0x48] sm:$0xff]
                  %1217 = vst [vmem:[%s1197 + $0x48] sm:$0xff] %v1216
                  %v1218 = vld [vmem:[%s1196 + $0x50] sm:$0xff]
                  %1219 = vst [vmem:[%s1197 + $0x50] sm:$0xff] %v1218
                  %v1220 = vld [vmem:[%s1196 + $0x58] sm:$0xff]
                  %1221 = vst [vmem:[%s1197 + $0x58] sm:$0xff] %v1220
                  %v1222 = vld [vmem:[%s1196 + $0x60] sm:$0xff]
                  %1223 = vst [vmem:[%s1197 + $0x60] sm:$0xff] %v1222
                  %v1224 = vld [vmem:[%s1196 + $0x68] sm:$0xff]
                  %1225 = vst [vmem:[%s1197 + $0x68] sm:$0xff] %v1224
                  %v1226 = vld [vmem:[%s1196 + $0x70] sm:$0xff]
                  %1227 = vst [vmem:[%s1197 + $0x70] sm:$0xff] %v1226
                  %v1228 = vld [vmem:[%s1196 + $0x78] sm:$0xff]
                  %1229 = vst [vmem:[%s1197 + $0x78] sm:$0xff] %v1228
                  %v1230 = vld [vmem:[%s1196 + $0x80] sm:$0xff]
                  %1231 = vst [vmem:[%s1197 + $0x80] sm:$0xff] %v1230
                  %v1232 = vld [vmem:[%s1196 + $0x88] sm:$0xff]
                  %1233 = vst [vmem:[%s1197 + $0x88] sm:$0xff] %v1232
                  %v1234 = vld [vmem:[%s1196 + $0x90] sm:$0xff]
                  %1235 = vst [vmem:[%s1197 + $0x90] sm:$0xff] %v1234
                  %v1236 = vld [vmem:[%s1196 + $0x98] sm:$0xff]
                  %1237 = vst [vmem:[%s1197 + $0x98] sm:$0xff] %v1236
                  %v1238 = vld [vmem:[%s1196 + $0xa0] sm:$0xff]
                  %1239 = vst [vmem:[%s1197 + $0xa0] sm:$0xff] %v1238
                  %v1240 = vld [vmem:[%s1196 + $0xa8] sm:$0xff]
                  %1241 = vst [vmem:[%s1197 + $0xa8] sm:$0xff] %v1240
                  %v1242 = vld [vmem:[%s1196 + $0xb0] sm:$0xff]
                  %1243 = vst [vmem:[%s1197 + $0xb0] sm:$0xff] %v1242
                  %v1244 = vld [vmem:[%s1196 + $0xb8] sm:$0xff]
                  %1245 = vst [vmem:[%s1197 + $0xb8] sm:$0xff] %v1244
                  %v1246 = vld [vmem:[%s1196 + $0xc0] sm:$0xff]
                  %1247 = vst [vmem:[%s1197 + $0xc0] sm:$0xff] %v1246
                  %s1248 = sadd.s32 1, %s1195
                  %p1249 = scmp.ge.s32.totalorder %s1248, %s1187
                  %s1250 = scalar_select %p1249, 0, %s1248
                  %s1251 = smul.u32 %s1250, 200
                  %s1252 = smul.u32 %s1250, 200
                  %s1253 = scalar_lea.vmem %s1072, %s1251 [#allocation3]
                  %s1254 = scalar_lea.vmem %s1083, %s1252
                $region87: #{mlp_block.1} parent=81 // loop_footer
                  %s1192 = sadd.s32 %s1190, 1
                $region88: #{mlp_block.1} parent=81 // loop_footer_branch
                  %1189 = sbr.rel target = $region84
                $region89: #{mlp_block.1} parent=81 // loop_exit
                  _
                %s1255 = sdiv.u32.pop %s1079, 25
                %s1256 = srem.u32.pop %s1079, 25
                %s1257 = smul.u32 %s1255, 25
                %s1258 = smul.u32 8, %s1257
                %s1259 = scalar_lea.vmem %s1072, %s1258 [#allocation3]
                %s1260 = smul.u32 8, %s1257
                %s1261 = scalar_lea.vmem %s1083, %s1260
                // While loop
                $region90: #{mlp_block.1} parent=81 // loop_pre_header
                  _
                $region91: #{mlp_block.1} parent=81 // loop_header
                  %s1263 = sphi 0, %s1265
                  %p1264 = scmp.ge.s32.totalorder %s1263, %s1256
                  %s1268 = sphi 0, %s1275
                  %s1269 = sphi %s1259, %s1278
                  %s1270 = sphi %s1261, %s1279
                $region92: #{mlp_block.1} parent=81 // loop_header_branch
                  %1267 = sbr.rel (%p1264) target = $region96
                $region93: #{mlp_block.1} parent=81 // loop_body
                  %v1271 = vld [vmem:[%s1269] sm:$0xff]
                  %1272 = vst [vmem:[%s1270] sm:$0xff] %v1271
                  %s1273 = sadd.s32 1, %s1268
                  %p1274 = scmp.ge.s32.totalorder %s1273, %s1256
                  %s1275 = scalar_select %p1274, 0, %s1273
                  %s1276 = smul.u32 %s1275, 8
                  %s1277 = smul.u32 %s1275, 8
                  %s1278 = scalar_lea.vmem %s1259, %s1276 [#allocation3]
                  %s1279 = scalar_lea.vmem %s1261, %s1277
                $region94: #{mlp_block.1} parent=81 // loop_footer
                  %s1265 = sadd.s32 %s1263, 1
                $region95: #{mlp_block.1} parent=81 // loop_footer_branch
                  %1262 = sbr.rel target = $region91
                $region96: #{mlp_block.1} parent=81 // loop_exit
                  _
              $region82: #{mlp_block.1} parent=59 // pred_fallthru
                _
              // Predicated region
              $region97: #{mlp_block.1} parent=59 // pred_check
                _
              $region98: #{mlp_block.1} parent=59 // pred_check_branch
                %1281 = sbr.rel target = $region100
              $region99: #{mlp_block.1} parent=59 // pred_region
                _
              $region100: #{mlp_block.1} parent=59 // pred_fallthru
                _
            $region60: #{mlp_block.1} parent=55 // pred_fallthru
              _
            // Predicated region
            $region61: #{mlp_block.1} parent=55 // pred_check
              _
            $region62: #{mlp_block.1} parent=55 // pred_check_branch
              %1090 = sbr.rel target = $region64
            $region63: #{mlp_block.1} parent=55 // pred_region
              %s1092 = sdiv.u32.pop %s1079, 25
              %s1093 = srem.u32.pop %s1079, 25
              // While loop
              $region65: #{mlp_block.1} parent=63 // loop_pre_header
                _
              $region66: #{mlp_block.1} parent=63 // loop_header
                %s1095 = sphi 0, %s1097
                %p1096 = scmp.ge.s32.totalorder %s1095, %s1092
                %s1100 = sphi 0, %s1155
                %s1101 = sphi %s1072, %s1158
                %s1102 = sphi %s1083, %s1159
              $region67: #{mlp_block.1} parent=63 // loop_header_branch
                %1099 = sbr.rel (%p1096) target = $region71
              $region68: #{mlp_block.1} parent=63 // loop_body
                %v1103 = vld [vmem:[%s1101] sm:$0xff]
                %1104 = vst [vmem:[%s1102] sm:$0xff] %v1103
                %v1105 = vld [vmem:[%s1101 + $0x8] sm:$0xff]
                %1106 = vst [vmem:[%s1102 + $0x8] sm:$0xff] %v1105
                %v1107 = vld [vmem:[%s1101 + $0x10] sm:$0xff]
                %1108 = vst [vmem:[%s1102 + $0x10] sm:$0xff] %v1107
                %v1109 = vld [vmem:[%s1101 + $0x18] sm:$0xff]
                %1110 = vst [vmem:[%s1102 + $0x18] sm:$0xff] %v1109
                %v1111 = vld [vmem:[%s1101 + $0x20] sm:$0xff]
                %1112 = vst [vmem:[%s1102 + $0x20] sm:$0xff] %v1111
                %v1113 = vld [vmem:[%s1101 + $0x28] sm:$0xff]
                %1114 = vst [vmem:[%s1102 + $0x28] sm:$0xff] %v1113
                %v1115 = vld [vmem:[%s1101 + $0x30] sm:$0xff]
                %1116 = vst [vmem:[%s1102 + $0x30] sm:$0xff] %v1115
                %v1117 = vld [vmem:[%s1101 + $0x38] sm:$0xff]
                %1118 = vst [vmem:[%s1102 + $0x38] sm:$0xff] %v1117
                %v1119 = vld [vmem:[%s1101 + $0x40] sm:$0xff]
                %1120 = vst [vmem:[%s1102 + $0x40] sm:$0xff] %v1119
                %v1121 = vld [vmem:[%s1101 + $0x48] sm:$0xff]
                %1122 = vst [vmem:[%s1102 + $0x48] sm:$0xff] %v1121
                %v1123 = vld [vmem:[%s1101 + $0x50] sm:$0xff]
                %1124 = vst [vmem:[%s1102 + $0x50] sm:$0xff] %v1123
                %v1125 = vld [vmem:[%s1101 + $0x58] sm:$0xff]
                %1126 = vst [vmem:[%s1102 + $0x58] sm:$0xff] %v1125
                %v1127 = vld [vmem:[%s1101 + $0x60] sm:$0xff]
                %1128 = vst [vmem:[%s1102 + $0x60] sm:$0xff] %v1127
                %v1129 = vld [vmem:[%s1101 + $0x68] sm:$0xff]
                %1130 = vst [vmem:[%s1102 + $0x68] sm:$0xff] %v1129
                %v1131 = vld [vmem:[%s1101 + $0x70] sm:$0xff]
                %1132 = vst [vmem:[%s1102 + $0x70] sm:$0xff] %v1131
                %v1133 = vld [vmem:[%s1101 + $0x78] sm:$0xff]
                %1134 = vst [vmem:[%s1102 + $0x78] sm:$0xff] %v1133
                %v1135 = vld [vmem:[%s1101 + $0x80] sm:$0xff]
                %1136 = vst [vmem:[%s1102 + $0x80] sm:$0xff] %v1135
                %v1137 = vld [vmem:[%s1101 + $0x88] sm:$0xff]
                %1138 = vst [vmem:[%s1102 + $0x88] sm:$0xff] %v1137
                %v1139 = vld [vmem:[%s1101 + $0x90] sm:$0xff]
                %1140 = vst [vmem:[%s1102 + $0x90] sm:$0xff] %v1139
                %v1141 = vld [vmem:[%s1101 + $0x98] sm:$0xff]
                %1142 = vst [vmem:[%s1102 + $0x98] sm:$0xff] %v1141
                %v1143 = vld [vmem:[%s1101 + $0xa0] sm:$0xff]
                %1144 = vst [vmem:[%s1102 + $0xa0] sm:$0xff] %v1143
                %v1145 = vld [vmem:[%s1101 + $0xa8] sm:$0xff]
                %1146 = vst [vmem:[%s1102 + $0xa8] sm:$0xff] %v1145
                %v1147 = vld [vmem:[%s1101 + $0xb0] sm:$0xff]
                %1148 = vst [vmem:[%s1102 + $0xb0] sm:$0xff] %v1147
                %v1149 = vld [vmem:[%s1101 + $0xb8] sm:$0xff]
                %1150 = vst [vmem:[%s1102 + $0xb8] sm:$0xff] %v1149
                %v1151 = vld [vmem:[%s1101 + $0xc0] sm:$0xff]
                %1152 = vst [vmem:[%s1102 + $0xc0] sm:$0xff] %v1151
                %s1153 = sadd.s32 1, %s1100
                %p1154 = scmp.ge.s32.totalorder %s1153, %s1092
                %s1155 = scalar_select %p1154, 0, %s1153
                %s1156 = smul.u32 %s1155, 200
                %s1157 = smul.u32 %s1155, 200
                %s1158 = scalar_lea.vmem %s1072, %s1156 [#allocation3]
                %s1159 = scalar_lea.vmem %s1083, %s1157
              $region69: #{mlp_block.1} parent=63 // loop_footer
                %s1097 = sadd.s32 %s1095, 1
              $region70: #{mlp_block.1} parent=63 // loop_footer_branch
                %1094 = sbr.rel target = $region66
              $region71: #{mlp_block.1} parent=63 // loop_exit
                _
              %s1160 = sdiv.u32.pop %s1079, 25
              %s1161 = srem.u32.pop %s1079, 25
              %s1162 = smul.u32 %s1160, 25
              %s1163 = smul.u32 8, %s1162
              %s1164 = scalar_lea.vmem %s1072, %s1163 [#allocation3]
              %s1165 = smul.u32 8, %s1162
              %s1166 = scalar_lea.vmem %s1083, %s1165
              // While loop
              $region72: #{mlp_block.1} parent=63 // loop_pre_header
                _
              $region73: #{mlp_block.1} parent=63 // loop_header
                %s1168 = sphi 0, %s1170
                %p1169 = scmp.ge.s32.totalorder %s1168, %s1161
                %s1173 = sphi 0, %s1180
                %s1174 = sphi %s1164, %s1183
                %s1175 = sphi %s1166, %s1184
              $region74: #{mlp_block.1} parent=63 // loop_header_branch
                %1172 = sbr.rel (%p1169) target = $region78
              $region75: #{mlp_block.1} parent=63 // loop_body
                %v1176 = vld [vmem:[%s1174] sm:$0xff]
                %1177 = vst [vmem:[%s1175] sm:$0xff] %v1176
                %s1178 = sadd.s32 1, %s1173
                %p1179 = scmp.ge.s32.totalorder %s1178, %s1161
                %s1180 = scalar_select %p1179, 0, %s1178
                %s1181 = smul.u32 %s1180, 8
                %s1182 = smul.u32 %s1180, 8
                %s1183 = scalar_lea.vmem %s1164, %s1181 [#allocation3]
                %s1184 = scalar_lea.vmem %s1166, %s1182
              $region76: #{mlp_block.1} parent=63 // loop_footer
                %s1170 = sadd.s32 %s1168, 1
              $region77: #{mlp_block.1} parent=63 // loop_footer_branch
                %1167 = sbr.rel target = $region73
              $region78: #{mlp_block.1} parent=63 // loop_exit
                _
            $region64: #{mlp_block.1} parent=55 // pred_fallthru
              _
          $region56: #{mlp_block.1} parent=51 // pred_fallthru
            _
          %1282 = vnop
        $region52: #{mlp_block.1} parent=39 // pred_fallthru
          _
      $region40: #{mlp_block.1} parent=5 // pred_fallthru
        _
      %p1283 = scmp.le.s32.totalorder 2, %s11
      // Predicated region
      $region101: #{mlp_block.1} parent=5 // pred_check
        %p1284 = pneg %p1283
      $region102: #{mlp_block.1} parent=5 // pred_check_branch
        %1286 = sbr.rel (%p1284) target = $region104
      $region103: #{mlp_block.1} parent=5 // pred_region
        %s1287 = ssub.s32 %s11, 2
        // Predicated region
        $region105: #{mlp_block.1} parent=103 // pred_check
          %p1288 = pneg %p177
        $region106: #{mlp_block.1} parent=103 // pred_check_branch
          %1290 = sbr.rel (%p1288) target = $region108
        $region107: #{mlp_block.1} parent=103 // pred_region
          %s1291 = sand.u32 %s162, 1
          %s1292 = sand.u32 %s162, 1
          %s1293 = smul.addr %s1292, 200
          %s1294 = scalar_lea.vmem [#allocation3], %s1293
        $region108: #{mlp_block.1} parent=103 // pred_fallthru
          _
      $region104: #{mlp_block.1} parent=5 // pred_fallthru
        _
    $region6: #{mlp_block.1} parent=1 // loop_footer
      %s15 = sadd.s32 1, %s11
    $region7: #{mlp_block.1} parent=1 // loop_footer_branch
      %10 = sbr.rel target = $region3
    $region8: #{mlp_block.1} parent=1 // loop_exit
      _

</llo_original>
